<compile_context>
chip_gen: v7x
topology: tpu7x:2x2x1
jax: 0.10.0
libtpu: 0.0.40
codegen_flags: <defaults>
</compile_context>

<pallas_src>
import functools
import math

import jax
import jax.numpy as jnp
import numpy as np
from jax.experimental import pallas as pl
from jax.experimental.pallas import tpu as pltpu


def _attn_pool_kernel(x_ref, pos_sp_ref, pos_cls_ref, seg_ref, rep_ref,
                      w_in_ref, b_in_ref, sel_eh_ref, sel_he_ref, wc_ref,
                      bc_ref, out_ref, xcat_ref, p_ref, *, num_batch, hw,
                      embed_dim, scale):
  """One grid step == `num_batch` (TB) images.

  Row layout of the assembled token slab (R = TB*(hw+1) rows):
    rows [0, TB*hw)   : spatial tokens, batch-major (row b*hw + j)
    rows [TB*hw, R)   : mean/CLS tokens, one per image (row TB*hw + b)

  x_ref      : (1, TB*HW, E) bf16   spatial tokens of this step's TB images
  pos_sp_ref : (TB*HW, E)    f32    pos_emb[1:] tiled TB times (resident)
  pos_cls_ref: (1, E)        f32    pos_emb[0]
  seg_ref    : (TB, R)       bf16   seg[b, r] = 1.0 iff row r belongs to image b
  rep_ref    : (R, TB)       bf16   transpose of seg (query broadcast)
  w_in_ref   : (E, 3E)       bf16   fused [Wq | Wk | Wv]   (y = x @ w + b layout)
  b_in_ref   : (1, 3E)       f32
  sel_eh_ref : (E, H)        bf16   block-diagonal head selection
  sel_he_ref : (H, E)        bf16
  wc_ref     : (E, E_out)    bf16   output projection
  bc_ref     : (1, E_out)    f32
  out_ref    : (1, TB, E_out) f32
  xcat_ref   : (R, E) bf16 VMEM scratch (token slab, matmul-operand dtype)
  p_ref      : (R, H) bf16 VMEM scratch (normalised attention weights)
  """
  tb, e = num_batch, embed_dim
  sp = tb * hw
  f32 = jnp.float32
  bf16 = jnp.bfloat16

  # ---- assemble the token slab: spatial tokens first, mean/CLS tokens last ----
  x2 = x_ref[0]                                                       # (sp, e) bf16
  xcat_ref[0:sp, :] = (x2.astype(f32) + pos_sp_ref[...]).astype(bf16)

  seg = seg_ref[...]                                                  # (tb, R)
  msum = jnp.dot(seg[:, 0:sp], x2, preferred_element_type=f32)        # per-image sums of raw tokens
  xmean = msum * (1.0 / hw) + pos_cls_ref[...]                        # (tb, e) f32
  xcat_ref[sp:, :] = xmean.astype(bf16)

  # ---- fused QKV projection: one MXU pass with M = TB*(HW+1) rows ----
  xcat = xcat_ref[...]                                                # (R, e) bf16
  qkv = jnp.dot(xcat, w_in_ref[...], preferred_element_type=f32) + b_in_ref[...]
  q = qkv[sp:, 0:e] * scale                                           # (tb, e): CLS queries only
  k = qkv[:, e:2 * e]                                                 # (R, e)
  v = qkv[:, 2 * e:3 * e]                                             # (R, e)

  # ---- per-head scores via block-diagonal head selection (bf16 MXU operands) ----
  qb = jnp.dot(rep_ref[...], q.astype(bf16), preferred_element_type=f32)            # q[b] -> batch-b rows
  s = jnp.dot((qb * k).astype(bf16), sel_eh_ref[...], preferred_element_type=f32)   # (R, H)

  # ---- per-batch softmax over the L = hw+1 keys (tiny tiles; f32 VPU/EUP math) ----
  for b in range(tb):
    s_sp = s[b * hw:(b + 1) * hw, :]                                  # (hw, H) spatial keys of image b
    s_m = s[sp + b:sp + b + 1, :]                                     # (1, H)  mean/CLS key of image b
    m = jnp.maximum(jnp.max(s_sp, axis=0, keepdims=True), s_m)
    e_sp = jnp.exp(s_sp - m)
    e_m = jnp.exp(s_m - m)
    inv = 1.0 / (jnp.sum(e_sp, axis=0, keepdims=True) + e_m)          # exact divide (denominator is (1, H))
    p_ref[b * hw:(b + 1) * hw, :] = (e_sp * inv).astype(bf16)
    p_ref[sp + b:sp + b + 1, :] = (e_m * inv).astype(bf16)

  # ---- broadcast head weights to lanes, weight V, per-image reduction ----
  p_full = jnp.dot(p_ref[...], sel_he_ref[...], preferred_element_type=f32)          # (R, e)
  o = jnp.dot(seg, (p_full * v).astype(bf16), preferred_element_type=f32)            # (tb, e)

  out = jnp.dot(o.astype(bf16), wc_ref[...], preferred_element_type=f32) + bc_ref[...]
  out_ref[0] = out.astype(out_ref.dtype)                              # dense (tb, E_out) slab


def init_params(key, spacial_dim, embed_dim, output_dim):
  L = spacial_dim * spacial_dim + 1
  ks = jax.random.split(key, 9)
  bound = 1.0 / math.sqrt(embed_dim)
  def lin_w(k, out_d, in_d):  # nn.Linear-style init
    return jax.random.uniform(k, (out_d, in_d), jnp.float32, -bound, bound)
  def lin_b(k, out_d):
    return jax.random.uniform(k, (out_d,), jnp.float32, -bound, bound)
  return {
      "pos_emb": jax.random.normal(ks[0], (L, embed_dim), jnp.float32) / math.sqrt(embed_dim),
      "wq": lin_w(ks[1], embed_dim, embed_dim), "bq": lin_b(ks[2], embed_dim),
      "wk": lin_w(ks[3], embed_dim, embed_dim), "bk": lin_b(ks[4], embed_dim),
      "wv": lin_w(ks[5], embed_dim, embed_dim), "bv": lin_b(ks[6], embed_dim),
      "wc": lin_w(ks[7], output_dim, embed_dim), "bc": lin_b(ks[8], output_dim),
  }


def attention_pool2d(x_nchw, params, num_heads):
  """Pallas implementation of AttentionPool2d.forward; returns (N, output_dim)."""
  N, C, H, W = x_nchw.shape
  E = C
  HW = H * W
  L = HW + 1
  Dh = E // num_heads
  E_out = params["wc"].shape[0]
  scale = float(Dh) ** -0.5

  # Batch tile: TB images per grid step so the fused in-projection sees
  # M = TB*L >= ~256 rows when the batch allows it (also keeps the grid >= 2
  # at real batch sizes for v7x's two TensorCores).
  tb = min(N, max(1, math.ceil(256 / L)))
  steps = math.ceil(N / tb)
  n_pad = steps * tb
  SP = tb * HW                       # spatial rows per step
  R = SP + tb                        # + one mean/CLS row per image

  # ---- glue: NCHW -> (steps, TB*HW, E) bf16 token stream ----
  # TODO(synk): accept NHWC / pre-flattened tokens (or use allow_input_fusion) so this
  # transpose does not cost an extra HBM round trip before the kernel reads x.
  x_tok = jnp.transpose(x_nchw.reshape(N, C, HW), (0, 2, 1)).astype(jnp.bfloat16)
  if n_pad != N:
    x_tok = jnp.concatenate(
        [x_tok, jnp.zeros((n_pad - N, HW, E), jnp.bfloat16)], axis=0)
  x_blk = x_tok.reshape(steps, SP, E)

  # ---- glue: constants (resident in VMEM across the whole grid) ----
  pos = params["pos_emb"].astype(jnp.float32)                         # (L, E)
  pos_sp = jnp.tile(pos[1:], (tb, 1))                                 # (SP, E)
  pos_cls = pos[0:1]                                                  # (1, E)

  w_in = jnp.concatenate(
      [params["wq"].T, params["wk"].T, params["wv"].T], axis=1).astype(jnp.bfloat16)  # (E, 3E)
  b_in = jnp.concatenate(
      [params["bq"], params["bk"], params["bv"]]).reshape(1, 3 * E).astype(jnp.float32)
  wc = params["wc"].T.astype(jnp.bfloat16)                            # (E, E_out)
  bc = params["bc"].reshape(1, E_out).astype(jnp.float32)

  head_of_e = jnp.arange(E, dtype=jnp.int32) // Dh
  sel_eh = (head_of_e[:, None] ==
            jnp.arange(num_heads, dtype=jnp.int32)[None, :]).astype(jnp.bfloat16)     # (E, H)
  sel_he = sel_eh.T                                                   # (H, E)

  row_batch = jnp.concatenate(
      [jnp.repeat(jnp.arange(tb, dtype=jnp.int32), HW),
       jnp.arange(tb, dtype=jnp.int32)])
  rep = (row_batch[:, None] ==
         jnp.arange(tb, dtype=jnp.int32)[None, :]).astype(jnp.bfloat16)               # (R, TB)
  seg = rep.T                                                         # (TB, R)

  consts = (pos_sp, pos_cls, seg, rep, w_in, b_in, sel_eh, sel_he, wc, bc)

  kernel = functools.partial(_attn_pool_kernel, num_batch=tb, hw=HW,
                             embed_dim=E, scale=scale)

  def build(single_buffer_weights):
    def const_spec(a):
      nd = a.ndim
      kwargs = {}
      if single_buffer_weights:
        # Constant index_map: fetched once, keep a single resident buffer.
        kwargs["pipeline_mode"] = pl.Buffered(1)
      return pl.BlockSpec(a.shape, lambda i, _nd=nd: (0,) * _nd, **kwargs)

    nbuf = 1 if single_buffer_weights else 2
    need = (2 * SP * E * 2                          # double-buffered x blocks (bf16)
            + 2 * tb * E_out * 4                    # double-buffered output blocks
            + R * E * 2 + R * num_heads * 2         # VMEM scratch
            + nbuf * sum(int(a.size) * a.dtype.itemsize for a in consts))
    vmem_limit = int(min(max(2 * need, 32 * 1024 * 1024), 100 * 1024 * 1024))

    return pl.pallas_call(
        kernel,
        out_shape=jax.ShapeDtypeStruct((steps, tb, E_out), jnp.float32),
        grid_spec=pltpu.PrefetchScalarGridSpec(
            num_scalar_prefetch=0,
            grid=(steps,),
            in_specs=[pl.BlockSpec((1, SP, E), lambda i: (i, 0, 0))] +
                     [const_spec(a) for a in consts],
            out_specs=pl.BlockSpec((1, tb, E_out), lambda i: (i, 0, 0)),
            scratch_shapes=[pltpu.VMEM((R, E), jnp.bfloat16),
                            pltpu.VMEM((R, num_heads), jnp.bfloat16)],
        ),
        compiler_params=pltpu.CompilerParams(
            dimension_semantics=("parallel",),
            vmem_limit_bytes=vmem_limit),
    )

  try:
    out3 = build(True)(x_blk, *consts)
  except Exception:
    # Fallback if this jax build rejects single-buffered (Buffered(1)) specs.
    out3 = build(False)(x_blk, *consts)

  return out3.reshape(n_pad, E_out)[:N]


def attention_pool2d_reference(x_nchw, params, num_heads):
  """Pure-JAX f32 reference of the same math (sanity check)."""
  N, C, H, W = x_nchw.shape
  E, Dh = C, C // num_heads
  x_tok = x_nchw.reshape(N, C, H * W).transpose(0, 2, 1).astype(jnp.float32)
  x_seq = jnp.concatenate([x_tok.mean(axis=1, keepdims=True), x_tok], axis=1)
  x_seq = x_seq + params["pos_emb"][None]
  L = x_seq.shape[1]
  q = x_seq @ params["wq"].T + params["bq"]
  k = x_seq @ params["wk"].T + params["bk"]
  v = x_seq @ params["wv"].T + params["bv"]
  split = lambda t: t.reshape(N, L, num_heads, Dh).transpose(0, 2, 1, 3)
  qh = split(q) * (Dh ** -0.5)
  s = jnp.einsum("bhqd,bhkd->bhqk", qh, split(k))
  p = jax.nn.softmax(s, axis=-1)
  o = jnp.einsum("bhqk,bhkd->bhqd", p, split(v))
  o = o.transpose(0, 2, 1, 3).reshape(N, L, E)
  out = o @ params["wc"].T + params["bc"]
  return out[:, 0, :]


if __name__ == "__main__":
  # Small shapes consistent with the module: spacial_dim=4 -> H=W=4,
  # embed_dim=32, num_heads=4 (head_dim=8), output_dim=16, batch=2.
  spacial_dim, embed_dim, num_heads, output_dim, batch = 4, 32, 4, 16, 2

  key = jax.random.PRNGKey(0)
  k_params, k_x = jax.random.split(key)
  params = init_params(k_params, spacial_dim, embed_dim, output_dim)
  x = jax.random.normal(k_x, (batch, embed_dim, spacial_dim, spacial_dim), jnp.float32)

  out = jax.block_until_ready(attention_pool2d(x, params, num_heads))
  ref = jax.block_until_ready(attention_pool2d_reference(x, params, num_heads))
  assert out.shape == (batch, output_dim)
  assert np.allclose(np.asarray(out), np.asarray(ref), rtol=2e-2, atol=2e-2)

  # Also exercise the multi-step / padded-batch path of the batch-tiled grid.
  big_batch = 20
  xb = jax.random.normal(jax.random.PRNGKey(1),
                         (big_batch, embed_dim, spacial_dim, spacial_dim), jnp.float32)
  out_b = jax.block_until_ready(attention_pool2d(xb, params, num_heads))
  ref_b = jax.block_until_ready(attention_pool2d_reference(xb, params, num_heads))
  assert out_b.shape == (big_batch, output_dim)
  assert np.allclose(np.asarray(out_b), np.asarray(ref_b), rtol=2e-2, atol=2e-2)

  print("KERNEL_OK")
</pallas_src>

<mosaic_0001>
module attributes {stable_mosaic.version = 11 : i64} {
  func.func @_attn_pool_kernel(%arg0: i32, %arg1: memref<1x32x32xbf16, #tpu.memory_space<vmem>>, %arg2: memref<32x32xf32, #tpu.memory_space<vmem>>, %arg3: memref<1x32xf32, #tpu.memory_space<vmem>>, %arg4: memref<2x34xbf16, #tpu.memory_space<vmem>>, %arg5: memref<34x2xbf16, #tpu.memory_space<vmem>>, %arg6: memref<32x96xbf16, #tpu.memory_space<vmem>>, %arg7: memref<1x96xf32, #tpu.memory_space<vmem>>, %arg8: memref<32x4xbf16, #tpu.memory_space<vmem>>, %arg9: memref<4x32xbf16, #tpu.memory_space<vmem>>, %arg10: memref<32x16xbf16, #tpu.memory_space<vmem>>, %arg11: memref<1x16xf32, #tpu.memory_space<vmem>>, %arg12: memref<1x2x16xf32, #tpu.memory_space<vmem>>, %arg13: memref<34x32xbf16, #tpu.memory_space<vmem>>, %arg14: memref<34x4xbf16, #tpu.memory_space<vmem>>) attributes {dimension_semantics = [#tpu.dimension_semantics<parallel>], iteration_bounds = array<i64: 1>, scalar_prefetch = 0 : i64, scratch_operands = 2 : i64, tpu.core_type = #tpu.core_type<tc>, window_params = [{transform_indices = @transform_0, window_bounds = array<i64: 1, 32, 32>}, {pipeline_mode = #tpu.pipeline_mode<synchronous>, transform_indices = @transform_1, window_bounds = array<i64: 32, 32>}, {pipeline_mode = #tpu.pipeline_mode<synchronous>, transform_indices = @transform_2, window_bounds = array<i64: 1, 32>}, {pipeline_mode = #tpu.pipeline_mode<synchronous>, transform_indices = @transform_3, window_bounds = array<i64: 2, 34>}, {pipeline_mode = #tpu.pipeline_mode<synchronous>, transform_indices = @transform_4, window_bounds = array<i64: 34, 2>}, {pipeline_mode = #tpu.pipeline_mode<synchronous>, transform_indices = @transform_5, window_bounds = array<i64: 32, 96>}, {pipeline_mode = #tpu.pipeline_mode<synchronous>, transform_indices = @transform_6, window_bounds = array<i64: 1, 96>}, {pipeline_mode = #tpu.pipeline_mode<synchronous>, transform_indices = @transform_7, window_bounds = array<i64: 32, 4>}, {pipeline_mode = #tpu.pipeline_mode<synchronous>, transform_indices = @transform_8, window_bounds = array<i64: 4, 32>}, {pipeline_mode = #tpu.pipeline_mode<synchronous>, transform_indices = @transform_9, window_bounds = array<i64: 32, 16>}, {pipeline_mode = #tpu.pipeline_mode<synchronous>, transform_indices = @transform_10, window_bounds = array<i64: 1, 16>}, {transform_indices = @transform_11, window_bounds = array<i64: 1, 2, 16>}]} {
    %c0 = arith.constant 0 : index
    %c0_0 = arith.constant 0 : index
    %c0_1 = arith.constant 0 : index
    %0 = vector.load %arg1[%c0, %c0_0, %c0_1] : memref<1x32x32xbf16, #tpu.memory_space<vmem>>, vector<1x32x32xbf16>
    %1 = vector.shape_cast %0 : vector<1x32x32xbf16> to vector<32x32xbf16>
    %2 = arith.extf %1 : vector<32x32xbf16> to vector<32x32xf32>
    %c0_2 = arith.constant 0 : index
    %c0_3 = arith.constant 0 : index
    %3 = vector.load %arg2[%c0_2, %c0_3] : memref<32x32xf32, #tpu.memory_space<vmem>>, vector<32x32xf32>
    %4 = arith.addf %2, %3 : vector<32x32xf32>
    %5 = arith.truncf %4 : vector<32x32xf32> to vector<32x32xbf16>
    %c0_4 = arith.constant 0 : index
    %c0_5 = arith.constant 0 : index
    %6 = vector.load %arg13[%c0_4, %c0_5] : memref<34x32xbf16, #tpu.memory_space<vmem>>, vector<32x32xbf16>
    tpu.vector_store %arg13[%c0_4, %c0_5], %5 {strides = array<i32>} : memref<34x32xbf16, #tpu.memory_space<vmem>>, vector<32x32xbf16>,
    %c0_6 = arith.constant 0 : index
    %c0_7 = arith.constant 0 : index
    %7 = vector.load %arg4[%c0_6, %c0_7] : memref<2x34xbf16, #tpu.memory_space<vmem>>, vector<2x34xbf16>
    %8 = vector.extract_strided_slice %7 {offsets = [0, 0], sizes = [2, 32], strides = [1, 1]} : vector<2x34xbf16> to vector<2x32xbf16>
    %cst = arith.constant dense<0.000000e+00> : vector<2x32xf32>
    %9 = tpu.matmul %8, %1, %cst {dimension_numbers = #tpu.dot_dimension_numbers<[1], [0], [0], [1], [0, 0, 1, 1], [], []>} : vector<2x32xbf16>, vector<32x32xbf16>, vector<2x32xf32> -> vector<2x32xf32>
    %cst_8 = arith.constant 6.250000e-02 : f32
    %10 = vector.broadcast %cst_8 : f32 to vector<2x32xf32>
    %11 = arith.mulf %9, %10 : vector<2x32xf32>
    %c0_9 = arith.constant 0 : index
    %c0_10 = arith.constant 0 : index
    %12 = vector.load %arg3[%c0_9, %c0_10] : memref<1x32xf32, #tpu.memory_space<vmem>>, vector<1x32xf32>
    %13 = vector.broadcast %12 : vector<1x32xf32> to vector<2x32xf32>
    %14 = arith.addf %11, %13 : vector<2x32xf32>
    %15 = arith.truncf %14 : vector<2x32xf32> to vector<2x32xbf16>
    %c32 = arith.constant 32 : index
    %c0_11 = arith.constant 0 : index
    %16 = vector.load %arg13[%c32, %c0_11] : memref<34x32xbf16, #tpu.memory_space<vmem>>, vector<2x32xbf16>
    tpu.vector_store %arg13[%c32, %c0_11], %15 {strides = array<i32>} : memref<34x32xbf16, #tpu.memory_space<vmem>>, vector<2x32xbf16>,
    %c0_12 = arith.constant 0 : index
    %c0_13 = arith.constant 0 : index
    %17 = vector.load %arg13[%c0_12, %c0_13] : memref<34x32xbf16, #tpu.memory_space<vmem>>, vector<34x32xbf16>
    %c0_14 = arith.constant 0 : index
    %c0_15 = arith.constant 0 : index
    %18 = vector.load %arg6[%c0_14, %c0_15] : memref<32x96xbf16, #tpu.memory_space<vmem>>, vector<32x96xbf16>
    %cst_16 = arith.constant dense<0.000000e+00> : vector<34x96xf32>
    %19 = tpu.matmul %17, %18, %cst_16 {dimension_numbers = #tpu.dot_dimension_numbers<[1], [0], [0], [1], [0, 0, 1, 1], [], []>} : vector<34x32xbf16>, vector<32x96xbf16>, vector<34x96xf32> -> vector<34x96xf32>
    %c0_17 = arith.constant 0 : index
    %c0_18 = arith.constant 0 : index
    %20 = vector.load %arg7[%c0_17, %c0_18] : memref<1x96xf32, #tpu.memory_space<vmem>>, vector<1x96xf32>
    %21 = vector.broadcast %20 : vector<1x96xf32> to vector<34x96xf32>
    %22 = arith.addf %19, %21 : vector<34x96xf32>
    %23 = vector.extract_strided_slice %22 {offsets = [32, 0], sizes = [2, 32], strides = [1, 1]} : vector<34x96xf32> to vector<2x32xf32>
    %cst_19 = arith.constant 0.353553385 : f32
    %24 = vector.broadcast %cst_19 : f32 to vector<2x32xf32>
    %25 = arith.mulf %23, %24 : vector<2x32xf32>
    %26 = vector.extract_strided_slice %22 {offsets = [0, 32], sizes = [34, 32], strides = [1, 1]} : vector<34x96xf32> to vector<34x32xf32>
    %27 = vector.extract_strided_slice %22 {offsets = [0, 64], sizes = [34, 32], strides = [1, 1]} : vector<34x96xf32> to vector<34x32xf32>
    %c0_20 = arith.constant 0 : index
    %c0_21 = arith.constant 0 : index
    %28 = vector.load %arg5[%c0_20, %c0_21] : memref<34x2xbf16, #tpu.memory_space<vmem>>, vector<34x2xbf16>
    %29 = arith.truncf %25 : vector<2x32xf32> to vector<2x32xbf16>
    %cst_22 = arith.constant dense<0.000000e+00> : vector<34x32xf32>
    %30 = tpu.matmul %28, %29, %cst_22 {dimension_numbers = #tpu.dot_dimension_numbers<[1], [0], [0], [1], [0, 0, 1, 1], [], []>} : vector<34x2xbf16>, vector<2x32xbf16>, vector<34x32xf32> -> vector<34x32xf32>
    %31 = arith.mulf %30, %26 : vector<34x32xf32>
    %32 = arith.truncf %31 : vector<34x32xf32> to vector<34x32xbf16>
    %c0_23 = arith.constant 0 : index
    %c0_24 = arith.constant 0 : index
    %33 = vector.load %arg8[%c0_23, %c0_24] : memref<32x4xbf16, #tpu.memory_space<vmem>>, vector<32x4xbf16>
    %cst_25 = arith.constant dense<0.000000e+00> : vector<34x4xf32>
    %34 = tpu.matmul %32, %33, %cst_25 {dimension_numbers = #tpu.dot_dimension_numbers<[1], [0], [0], [1], [0, 0, 1, 1], [], []>} : vector<34x32xbf16>, vector<32x4xbf16>, vector<34x4xf32> -> vector<34x4xf32>
    %35 = vector.extract_strided_slice %34 {offsets = [0, 0], sizes = [16, 4], strides = [1, 1]} : vector<34x4xf32> to vector<16x4xf32>
    %36 = vector.extract_strided_slice %34 {offsets = [32, 0], sizes = [1, 4], strides = [1, 1]} : vector<34x4xf32> to vector<1x4xf32>
    %cst_26 = arith.constant dense<0xFF800000> : vector<4xf32>
    %37 = vector.multi_reduction <maximumf>, %35, %cst_26 [0] : vector<16x4xf32> to vector<4xf32>
    %38 = vector.shape_cast %37 : vector<4xf32> to vector<1x4xf32>
    %39 = arith.maximumf %38, %36 : vector<1x4xf32>
    %40 = vector.broadcast %39 : vector<1x4xf32> to vector<16x4xf32>
    %41 = arith.subf %35, %40 : vector<16x4xf32>
    %42 = math.exp %41 : vector<16x4xf32>
    %43 = arith.subf %36, %39 : vector<1x4xf32>
    %44 = math.exp %43 : vector<1x4xf32>
    %cst_27 = arith.constant dense<0.000000e+00> : vector<4xf32>
    %45 = vector.multi_reduction <add>, %42, %cst_27 [0] : vector<16x4xf32> to vector<4xf32>
    %46 = vector.shape_cast %45 : vector<4xf32> to vector<1x4xf32>
    %47 = arith.addf %46, %44 : vector<1x4xf32>
    %cst_28 = arith.constant 1.000000e+00 : f32
    %48 = vector.broadcast %cst_28 : f32 to vector<1x4xf32>
    %49 = arith.divf %48, %47 : vector<1x4xf32>
    %50 = vector.broadcast %49 : vector<1x4xf32> to vector<16x4xf32>
    %51 = arith.mulf %42, %50 : vector<16x4xf32>
    %52 = arith.truncf %51 : vector<16x4xf32> to vector<16x4xbf16>
    %c0_29 = arith.constant 0 : index
    %c0_30 = arith.constant 0 : index
    %53 = vector.load %arg14[%c0_29, %c0_30] : memref<34x4xbf16, #tpu.memory_space<vmem>>, vector<16x4xbf16>
    tpu.vector_store %arg14[%c0_29, %c0_30], %52 {strides = array<i32>} : memref<34x4xbf16, #tpu.memory_space<vmem>>, vector<16x4xbf16>,
    %54 = arith.mulf %44, %49 : vector<1x4xf32>
    %55 = arith.truncf %54 : vector<1x4xf32> to vector<1x4xbf16>
    %c32_31 = arith.constant 32 : index
    %c0_32 = arith.constant 0 : index
    %56 = vector.load %arg14[%c32_31, %c0_32] : memref<34x4xbf16, #tpu.memory_space<vmem>>, vector<1x4xbf16>
    tpu.vector_store %arg14[%c32_31, %c0_32], %55 {strides = array<i32>} : memref<34x4xbf16, #tpu.memory_space<vmem>>, vector<1x4xbf16>,
    %57 = vector.extract_strided_slice %34 {offsets = [16, 0], sizes = [16, 4], strides = [1, 1]} : vector<34x4xf32> to vector<16x4xf32>
    %58 = vector.extract_strided_slice %34 {offsets = [33, 0], sizes = [1, 4], strides = [1, 1]} : vector<34x4xf32> to vector<1x4xf32>
    %cst_33 = arith.constant dense<0xFF800000> : vector<4xf32>
    %59 = vector.multi_reduction <maximumf>, %57, %cst_33 [0] : vector<16x4xf32> to vector<4xf32>
    %60 = vector.shape_cast %59 : vector<4xf32> to vector<1x4xf32>
    %61 = arith.maximumf %60, %58 : vector<1x4xf32>
    %62 = vector.broadcast %61 : vector<1x4xf32> to vector<16x4xf32>
    %63 = arith.subf %57, %62 : vector<16x4xf32>
    %64 = math.exp %63 : vector<16x4xf32>
    %65 = arith.subf %58, %61 : vector<1x4xf32>
    %66 = math.exp %65 : vector<1x4xf32>
    %cst_34 = arith.constant dense<0.000000e+00> : vector<4xf32>
    %67 = vector.multi_reduction <add>, %64, %cst_34 [0] : vector<16x4xf32> to vector<4xf32>
    %68 = vector.shape_cast %67 : vector<4xf32> to vector<1x4xf32>
    %69 = arith.addf %68, %66 : vector<1x4xf32>
    %cst_35 = arith.constant 1.000000e+00 : f32
    %70 = vector.broadcast %cst_35 : f32 to vector<1x4xf32>
    %71 = arith.divf %70, %69 : vector<1x4xf32>
    %72 = vector.broadcast %71 : vector<1x4xf32> to vector<16x4xf32>
    %73 = arith.mulf %64, %72 : vector<16x4xf32>
    %74 = arith.truncf %73 : vector<16x4xf32> to vector<16x4xbf16>
    %c16 = arith.constant 16 : index
    %c0_36 = arith.constant 0 : index
    %75 = vector.load %arg14[%c16, %c0_36] : memref<34x4xbf16, #tpu.memory_space<vmem>>, vector<16x4xbf16>
    tpu.vector_store %arg14[%c16, %c0_36], %74 {strides = array<i32>} : memref<34x4xbf16, #tpu.memory_space<vmem>>, vector<16x4xbf16>,
    %76 = arith.mulf %66, %71 : vector<1x4xf32>
    %77 = arith.truncf %76 : vector<1x4xf32> to vector<1x4xbf16>
    %c33 = arith.constant 33 : index
    %c0_37 = arith.constant 0 : index
    %78 = vector.load %arg14[%c33, %c0_37] : memref<34x4xbf16, #tpu.memory_space<vmem>>, vector<1x4xbf16>
    tpu.vector_store %arg14[%c33, %c0_37], %77 {strides = array<i32>} : memref<34x4xbf16, #tpu.memory_space<vmem>>, vector<1x4xbf16>,
    %c0_38 = arith.constant 0 : index
    %c0_39 = arith.constant 0 : index
    %79 = vector.load %arg14[%c0_38, %c0_39] : memref<34x4xbf16, #tpu.memory_space<vmem>>, vector<34x4xbf16>
    %c0_40 = arith.constant 0 : index
    %c0_41 = arith.constant 0 : index
    %80 = vector.load %arg9[%c0_40, %c0_41] : memref<4x32xbf16, #tpu.memory_space<vmem>>, vector<4x32xbf16>
    %cst_42 = arith.constant dense<0.000000e+00> : vector<34x32xf32>
    %81 = tpu.matmul %79, %80, %cst_42 {dimension_numbers = #tpu.dot_dimension_numbers<[1], [0], [0], [1], [0, 0, 1, 1], [], []>} : vector<34x4xbf16>, vector<4x32xbf16>, vector<34x32xf32> -> vector<34x32xf32>
    %82 = arith.mulf %81, %27 : vector<34x32xf32>
    %83 = arith.truncf %82 : vector<34x32xf32> to vector<34x32xbf16>
    %cst_43 = arith.constant dense<0.000000e+00> : vector<2x32xf32>
    %84 = tpu.matmul %7, %83, %cst_43 {dimension_numbers = #tpu.dot_dimension_numbers<[1], [0], [0], [1], [0, 0, 1, 1], [], []>} : vector<2x34xbf16>, vector<34x32xbf16>, vector<2x32xf32> -> vector<2x32xf32>
    %85 = arith.truncf %84 : vector<2x32xf32> to vector<2x32xbf16>
    %c0_44 = arith.constant 0 : index
    %c0_45 = arith.constant 0 : index
    %86 = vector.load %arg10[%c0_44, %c0_45] : memref<32x16xbf16, #tpu.memory_space<vmem>>, vector<32x16xbf16>
    %cst_46 = arith.constant dense<0.000000e+00> : vector<2x16xf32>
    %87 = tpu.matmul %85, %86, %cst_46 {dimension_numbers = #tpu.dot_dimension_numbers<[1], [0], [0], [1], [0, 0, 1, 1], [], []>} : vector<2x32xbf16>, vector<32x16xbf16>, vector<2x16xf32> -> vector<2x16xf32>
    %c0_47 = arith.constant 0 : index
    %c0_48 = arith.constant 0 : index
    %88 = vector.load %arg11[%c0_47, %c0_48] : memref<1x16xf32, #tpu.memory_space<vmem>>, vector<1x16xf32>
    %89 = vector.broadcast %88 : vector<1x16xf32> to vector<2x16xf32>
    %90 = arith.addf %87, %89 : vector<2x16xf32>
    %c0_49 = arith.constant 0 : index
    %c0_50 = arith.constant 0 : index
    %c0_51 = arith.constant 0 : index
    %91 = vector.load %arg12[%c0_49, %c0_50, %c0_51] : memref<1x2x16xf32, #tpu.memory_space<vmem>>, vector<1x2x16xf32>
    %92 = vector.shape_cast %91 : vector<1x2x16xf32> to vector<2x16xf32>
    %93 = vector.shape_cast %90 : vector<2x16xf32> to vector<1x2x16xf32>
    tpu.vector_store %arg12[%c0_49, %c0_50, %c0_51], %93 {strides = array<i32>} : memref<1x2x16xf32, #tpu.memory_space<vmem>>, vector<1x2x16xf32>,
    return
  }
  func.func @transform_0(%arg0: i32) -> (i32, i32, i32) {
    %c0_i32 = arith.constant 0 : i32
    %c0_i32_0 = arith.constant 0 : i32
    %c0_i32_1 = arith.constant 0 : i32
    return %arg0, %c0_i32, %c0_i32_0 : i32, i32, i32
  }
  func.func @transform_1(%arg0: i32) -> (i32, i32) {
    %c0_i32 = arith.constant 0 : i32
    %c0_i32_0 = arith.constant 0 : i32
    %c0_i32_1 = arith.constant 0 : i32
    return %c0_i32, %c0_i32_0 : i32, i32
  }
  func.func @transform_2(%arg0: i32) -> (i32, i32) {
    %c0_i32 = arith.constant 0 : i32
    %c0_i32_0 = arith.constant 0 : i32
    %c0_i32_1 = arith.constant 0 : i32
    return %c0_i32, %c0_i32_0 : i32, i32
  }
  func.func @transform_3(%arg0: i32) -> (i32, i32) {
    %c0_i32 = arith.constant 0 : i32
    %c0_i32_0 = arith.constant 0 : i32
    %c0_i32_1 = arith.constant 0 : i32
    return %c0_i32, %c0_i32_0 : i32, i32
  }
  func.func @transform_4(%arg0: i32) -> (i32, i32) {
    %c0_i32 = arith.constant 0 : i32
    %c0_i32_0 = arith.constant 0 : i32
    %c0_i32_1 = arith.constant 0 : i32
    return %c0_i32, %c0_i32_0 : i32, i32
  }
  func.func @transform_5(%arg0: i32) -> (i32, i32) {
    %c0_i32 = arith.constant 0 : i32
    %c0_i32_0 = arith.constant 0 : i32
    %c0_i32_1 = arith.constant 0 : i32
    return %c0_i32, %c0_i32_0 : i32, i32
  }
  func.func @transform_6(%arg0: i32) -> (i32, i32) {
    %c0_i32 = arith.constant 0 : i32
    %c0_i32_0 = arith.constant 0 : i32
    %c0_i32_1 = arith.constant 0 : i32
    return %c0_i32, %c0_i32_0 : i32, i32
  }
  func.func @transform_7(%arg0: i32) -> (i32, i32) {
    %c0_i32 = arith.constant 0 : i32
    %c0_i32_0 = arith.constant 0 : i32
    %c0_i32_1 = arith.constant 0 : i32
    return %c0_i32, %c0_i32_0 : i32, i32
  }
  func.func @transform_8(%arg0: i32) -> (i32, i32) {
    %c0_i32 = arith.constant 0 : i32
    %c0_i32_0 = arith.constant 0 : i32
    %c0_i32_1 = arith.constant 0 : i32
    return %c0_i32, %c0_i32_0 : i32, i32
  }
  func.func @transform_9(%arg0: i32) -> (i32, i32) {
    %c0_i32 = arith.constant 0 : i32
    %c0_i32_0 = arith.constant 0 : i32
    %c0_i32_1 = arith.constant 0 : i32
    return %c0_i32, %c0_i32_0 : i32, i32
  }
  func.func @transform_10(%arg0: i32) -> (i32, i32) {
    %c0_i32 = arith.constant 0 : i32
    %c0_i32_0 = arith.constant 0 : i32
    %c0_i32_1 = arith.constant 0 : i32
    return %c0_i32, %c0_i32_0 : i32, i32
  }
  func.func @transform_11(%arg0: i32) -> (i32, i32, i32) {
    %c0_i32 = arith.constant 0 : i32
    %c0_i32_0 = arith.constant 0 : i32
    %c0_i32_1 = arith.constant 0 : i32
    return %arg0, %c0_i32, %c0_i32_0 : i32, i32, i32
  }
}

module attributes {stable_mosaic.version = 11 : i64} {
  func.func @_attn_pool_kernel(%arg0: i32, %arg1: memref<1x32x32xbf16, #tpu.memory_space<vmem>>, %arg2: memref<32x32xf32, #tpu.memory_space<vmem>>, %arg3: memref<1x32xf32, #tpu.memory_space<vmem>>, %arg4: memref<2x34xbf16, #tpu.memory_space<vmem>>, %arg5: memref<34x2xbf16, #tpu.memory_space<vmem>>, %arg6: memref<32x96xbf16, #tpu.memory_space<vmem>>, %arg7: memref<1x96xf32, #tpu.memory_space<vmem>>, %arg8: memref<32x4xbf16, #tpu.memory_space<vmem>>, %arg9: memref<4x32xbf16, #tpu.memory_space<vmem>>, %arg10: memref<32x16xbf16, #tpu.memory_space<vmem>>, %arg11: memref<1x16xf32, #tpu.memory_space<vmem>>, %arg12: memref<1x2x16xf32, #tpu.memory_space<vmem>>, %arg13: memref<34x32xbf16, #tpu.memory_space<vmem>>, %arg14: memref<34x4xbf16, #tpu.memory_space<vmem>>) attributes {dimension_semantics = [#tpu.dimension_semantics<parallel>], iteration_bounds = array<i64: 1>, scalar_prefetch = 0 : i64, scratch_operands = 2 : i64, tpu.core_type = #tpu.core_type<tc>, window_params = [{transform_indices = @transform_0, window_bounds = array<i64: 1, 32, 32>}, {pipeline_mode = #tpu.pipeline_mode<synchronous>, transform_indices = @transform_1, window_bounds = array<i64: 32, 32>}, {pipeline_mode = #tpu.pipeline_mode<synchronous>, transform_indices = @transform_2, window_bounds = array<i64: 1, 32>}, {pipeline_mode = #tpu.pipeline_mode<synchronous>, transform_indices = @transform_3, window_bounds = array<i64: 2, 34>}, {pipeline_mode = #tpu.pipeline_mode<synchronous>, transform_indices = @transform_4, window_bounds = array<i64: 34, 2>}, {pipeline_mode = #tpu.pipeline_mode<synchronous>, transform_indices = @transform_5, window_bounds = array<i64: 32, 96>}, {pipeline_mode = #tpu.pipeline_mode<synchronous>, transform_indices = @transform_6, window_bounds = array<i64: 1, 96>}, {pipeline_mode = #tpu.pipeline_mode<synchronous>, transform_indices = @transform_7, window_bounds = array<i64: 32, 4>}, {pipeline_mode = #tpu.pipeline_mode<synchronous>, transform_indices = @transform_8, window_bounds = array<i64: 4, 32>}, {pipeline_mode = #tpu.pipeline_mode<synchronous>, transform_indices = @transform_9, window_bounds = array<i64: 32, 16>}, {pipeline_mode = #tpu.pipeline_mode<synchronous>, transform_indices = @transform_10, window_bounds = array<i64: 1, 16>}, {transform_indices = @transform_11, window_bounds = array<i64: 1, 2, 16>}]} {
    %c0 = arith.constant 0 : index
    %c0_0 = arith.constant 0 : index
    %c0_1 = arith.constant 0 : index
    %0 = vector.load %arg1[%c0, %c0_0, %c0_1] : memref<1x32x32xbf16, #tpu.memory_space<vmem>>, vector<1x32x32xbf16>
    %1 = vector.shape_cast %0 : vector<1x32x32xbf16> to vector<32x32xbf16>
    %2 = arith.extf %1 : vector<32x32xbf16> to vector<32x32xf32>
    %c0_2 = arith.constant 0 : index
    %c0_3 = arith.constant 0 : index
    %3 = vector.load %arg2[%c0_2, %c0_3] : memref<32x32xf32, #tpu.memory_space<vmem>>, vector<32x32xf32>
    %4 = arith.addf %2, %3 : vector<32x32xf32>
    %5 = arith.truncf %4 : vector<32x32xf32> to vector<32x32xbf16>
    %c0_4 = arith.constant 0 : index
    %c0_5 = arith.constant 0 : index
    %6 = vector.load %arg13[%c0_4, %c0_5] : memref<34x32xbf16, #tpu.memory_space<vmem>>, vector<32x32xbf16>
    tpu.vector_store %arg13[%c0_4, %c0_5], %5 {strides = array<i32>} : memref<34x32xbf16, #tpu.memory_space<vmem>>, vector<32x32xbf16>,
    %c0_6 = arith.constant 0 : index
    %c0_7 = arith.constant 0 : index
    %7 = vector.load %arg4[%c0_6, %c0_7] : memref<2x34xbf16, #tpu.memory_space<vmem>>, vector<2x34xbf16>
    %8 = vector.extract_strided_slice %7 {offsets = [0, 0], sizes = [2, 32], strides = [1, 1]} : vector<2x34xbf16> to vector<2x32xbf16>
    %cst = arith.constant dense<0.000000e+00> : vector<2x32xf32>
    %9 = tpu.matmul %8, %1, %cst {dimension_numbers = #tpu.dot_dimension_numbers<[1], [0], [0], [1], [0, 0, 1, 1], [], []>} : vector<2x32xbf16>, vector<32x32xbf16>, vector<2x32xf32> -> vector<2x32xf32>
    %cst_8 = arith.constant 6.250000e-02 : f32
    %10 = vector.broadcast %cst_8 : f32 to vector<2x32xf32>
    %11 = arith.mulf %9, %10 : vector<2x32xf32>
    %c0_9 = arith.constant 0 : index
    %c0_10 = arith.constant 0 : index
    %12 = vector.load %arg3[%c0_9, %c0_10] : memref<1x32xf32, #tpu.memory_space<vmem>>, vector<1x32xf32>
    %13 = vector.broadcast %12 : vector<1x32xf32> to vector<2x32xf32>
    %14 = arith.addf %11, %13 : vector<2x32xf32>
    %15 = arith.truncf %14 : vector<2x32xf32> to vector<2x32xbf16>
    %c32 = arith.constant 32 : index
    %c0_11 = arith.constant 0 : index
    %16 = vector.load %arg13[%c32, %c0_11] : memref<34x32xbf16, #tpu.memory_space<vmem>>, vector<2x32xbf16>
    tpu.vector_store %arg13[%c32, %c0_11], %15 {strides = array<i32>} : memref<34x32xbf16, #tpu.memory_space<vmem>>, vector<2x32xbf16>,
    %c0_12 = arith.constant 0 : index
    %c0_13 = arith.constant 0 : index
    %17 = vector.load %arg13[%c0_12, %c0_13] : memref<34x32xbf16, #tpu.memory_space<vmem>>, vector<34x32xbf16>
    %c0_14 = arith.constant 0 : index
    %c0_15 = arith.constant 0 : index
    %18 = vector.load %arg6[%c0_14, %c0_15] : memref<32x96xbf16, #tpu.memory_space<vmem>>, vector<32x96xbf16>
    %cst_16 = arith.constant dense<0.000000e+00> : vector<34x96xf32>
    %19 = tpu.matmul %17, %18, %cst_16 {dimension_numbers = #tpu.dot_dimension_numbers<[1], [0], [0], [1], [0, 0, 1, 1], [], []>} : vector<34x32xbf16>, vector<32x96xbf16>, vector<34x96xf32> -> vector<34x96xf32>
    %c0_17 = arith.constant 0 : index
    %c0_18 = arith.constant 0 : index
    %20 = vector.load %arg7[%c0_17, %c0_18] : memref<1x96xf32, #tpu.memory_space<vmem>>, vector<1x96xf32>
    %21 = vector.broadcast %20 : vector<1x96xf32> to vector<34x96xf32>
    %22 = arith.addf %19, %21 : vector<34x96xf32>
    %23 = vector.extract_strided_slice %22 {offsets = [32, 0], sizes = [2, 32], strides = [1, 1]} : vector<34x96xf32> to vector<2x32xf32>
    %cst_19 = arith.constant 0.353553385 : f32
    %24 = vector.broadcast %cst_19 : f32 to vector<2x32xf32>
    %25 = arith.mulf %23, %24 : vector<2x32xf32>
    %26 = vector.extract_strided_slice %22 {offsets = [0, 32], sizes = [34, 32], strides = [1, 1]} : vector<34x96xf32> to vector<34x32xf32>
    %27 = vector.extract_strided_slice %22 {offsets = [0, 64], sizes = [34, 32], strides = [1, 1]} : vector<34x96xf32> to vector<34x32xf32>
    %c0_20 = arith.constant 0 : index
    %c0_21 = arith.constant 0 : index
    %28 = vector.load %arg5[%c0_20, %c0_21] : memref<34x2xbf16, #tpu.memory_space<vmem>>, vector<34x2xbf16>
    %29 = arith.truncf %25 : vector<2x32xf32> to vector<2x32xbf16>
    %cst_22 = arith.constant dense<0.000000e+00> : vector<34x32xf32>
    %30 = tpu.matmul %28, %29, %cst_22 {dimension_numbers = #tpu.dot_dimension_numbers<[1], [0], [0], [1], [0, 0, 1, 1], [], []>} : vector<34x2xbf16>, vector<2x32xbf16>, vector<34x32xf32> -> vector<34x32xf32>
    %31 = arith.mulf %30, %26 : vector<34x32xf32>
    %32 = arith.truncf %31 : vector<34x32xf32> to vector<34x32xbf16>
    %c0_23 = arith.constant 0 : index
    %c0_24 = arith.constant 0 : index
    %33 = vector.load %arg8[%c0_23, %c0_24] : memref<32x4xbf16, #tpu.memory_space<vmem>>, vector<32x4xbf16>
    %cst_25 = arith.constant dense<0.000000e+00> : vector<34x4xf32>
    %34 = tpu.matmul %32, %33, %cst_25 {dimension_numbers = #tpu.dot_dimension_numbers<[1], [0], [0], [1], [0, 0, 1, 1], [], []>} : vector<34x32xbf16>, vector<32x4xbf16>, vector<34x4xf32> -> vector<34x4xf32>
    %35 = vector.extract_strided_slice %34 {offsets = [0, 0], sizes = [16, 4], strides = [1, 1]} : vector<34x4xf32> to vector<16x4xf32>
    %36 = vector.extract_strided_slice %34 {offsets = [32, 0], sizes = [1, 4], strides = [1, 1]} : vector<34x4xf32> to vector<1x4xf32>
    %cst_26 = arith.constant dense<0xFF800000> : vector<4xf32>
    %37 = vector.multi_reduction <maximumf>, %35, %cst_26 [0] : vector<16x4xf32> to vector<4xf32>
    %38 = vector.shape_cast %37 : vector<4xf32> to vector<1x4xf32>
    %39 = arith.maximumf %38, %36 : vector<1x4xf32>
    %40 = vector.broadcast %39 : vector<1x4xf32> to vector<16x4xf32>
    %41 = arith.subf %35, %40 : vector<16x4xf32>
    %42 = math.exp %41 : vector<16x4xf32>
    %43 = arith.subf %36, %39 : vector<1x4xf32>
    %44 = math.exp %43 : vector<1x4xf32>
    %cst_27 = arith.constant dense<0.000000e+00> : vector<4xf32>
    %45 = vector.multi_reduction <add>, %42, %cst_27 [0] : vector<16x4xf32> to vector<4xf32>
    %46 = vector.shape_cast %45 : vector<4xf32> to vector<1x4xf32>
    %47 = arith.addf %46, %44 : vector<1x4xf32>
    %cst_28 = arith.constant 1.000000e+00 : f32
    %48 = vector.broadcast %cst_28 : f32 to vector<1x4xf32>
    %49 = arith.divf %48, %47 : vector<1x4xf32>
    %50 = vector.broadcast %49 : vector<1x4xf32> to vector<16x4xf32>
    %51 = arith.mulf %42, %50 : vector<16x4xf32>
    %52 = arith.truncf %51 : vector<16x4xf32> to vector<16x4xbf16>
    %c0_29 = arith.constant 0 : index
    %c0_30 = arith.constant 0 : index
    %53 = vector.load %arg14[%c0_29, %c0_30] : memref<34x4xbf16, #tpu.memory_space<vmem>>, vector<16x4xbf16>
    tpu.vector_store %arg14[%c0_29, %c0_30], %52 {strides = array<i32>} : memref<34x4xbf16, #tpu.memory_space<vmem>>, vector<16x4xbf16>,
    %54 = arith.mulf %44, %49 : vector<1x4xf32>
    %55 = arith.truncf %54 : vector<1x4xf32> to vector<1x4xbf16>
    %c32_31 = arith.constant 32 : index
    %c0_32 = arith.constant 0 : index
    %56 = vector.load %arg14[%c32_31, %c0_32] : memref<34x4xbf16, #tpu.memory_space<vmem>>, vector<1x4xbf16>
    tpu.vector_store %arg14[%c32_31, %c0_32], %55 {strides = array<i32>} : memref<34x4xbf16, #tpu.memory_space<vmem>>, vector<1x4xbf16>,
    %57 = vector.extract_strided_slice %34 {offsets = [16, 0], sizes = [16, 4], strides = [1, 1]} : vector<34x4xf32> to vector<16x4xf32>
    %58 = vector.extract_strided_slice %34 {offsets = [33, 0], sizes = [1, 4], strides = [1, 1]} : vector<34x4xf32> to vector<1x4xf32>
    %cst_33 = arith.constant dense<0xFF800000> : vector<4xf32>
    %59 = vector.multi_reduction <maximumf>, %57, %cst_33 [0] : vector<16x4xf32> to vector<4xf32>
    %60 = vector.shape_cast %59 : vector<4xf32> to vector<1x4xf32>
    %61 = arith.maximumf %60, %58 : vector<1x4xf32>
    %62 = vector.broadcast %61 : vector<1x4xf32> to vector<16x4xf32>
    %63 = arith.subf %57, %62 : vector<16x4xf32>
    %64 = math.exp %63 : vector<16x4xf32>
    %65 = arith.subf %58, %61 : vector<1x4xf32>
    %66 = math.exp %65 : vector<1x4xf32>
    %cst_34 = arith.constant dense<0.000000e+00> : vector<4xf32>
    %67 = vector.multi_reduction <add>, %64, %cst_34 [0] : vector<16x4xf32> to vector<4xf32>
    %68 = vector.shape_cast %67 : vector<4xf32> to vector<1x4xf32>
    %69 = arith.addf %68, %66 : vector<1x4xf32>
    %cst_35 = arith.constant 1.000000e+00 : f32
    %70 = vector.broadcast %cst_35 : f32 to vector<1x4xf32>
    %71 = arith.divf %70, %69 : vector<1x4xf32>
    %72 = vector.broadcast %71 : vector<1x4xf32> to vector<16x4xf32>
    %73 = arith.mulf %64, %72 : vector<16x4xf32>
    %74 = arith.truncf %73 : vector<16x4xf32> to vector<16x4xbf16>
    %c16 = arith.constant 16 : index
    %c0_36 = arith.constant 0 : index
    %75 = vector.load %arg14[%c16, %c0_36] : memref<34x4xbf16, #tpu.memory_space<vmem>>, vector<16x4xbf16>
    tpu.vector_store %arg14[%c16, %c0_36], %74 {strides = array<i32>} : memref<34x4xbf16, #tpu.memory_space<vmem>>, vector<16x4xbf16>,
    %76 = arith.mulf %66, %71 : vector<1x4xf32>
    %77 = arith.truncf %76 : vector<1x4xf32> to vector<1x4xbf16>
    %c33 = arith.constant 33 : index
    %c0_37 = arith.constant 0 : index
    %78 = vector.load %arg14[%c33, %c0_37] : memref<34x4xbf16, #tpu.memory_space<vmem>>, vector<1x4xbf16>
    tpu.vector_store %arg14[%c33, %c0_37], %77 {strides = array<i32>} : memref<34x4xbf16, #tpu.memory_space<vmem>>, vector<1x4xbf16>,
    %c0_38 = arith.constant 0 : index
    %c0_39 = arith.constant 0 : index
    %79 = vector.load %arg14[%c0_38, %c0_39] : memref<34x4xbf16, #tpu.memory_space<vmem>>, vector<34x4xbf16>
    %c0_40 = arith.constant 0 : index
    %c0_41 = arith.constant 0 : index
    %80 = vector.load %arg9[%c0_40, %c0_41] : memref<4x32xbf16, #tpu.memory_space<vmem>>, vector<4x32xbf16>
    %cst_42 = arith.constant dense<0.000000e+00> : vector<34x32xf32>
    %81 = tpu.matmul %79, %80, %cst_42 {dimension_numbers = #tpu.dot_dimension_numbers<[1], [0], [0], [1], [0, 0, 1, 1], [], []>} : vector<34x4xbf16>, vector<4x32xbf16>, vector<34x32xf32> -> vector<34x32xf32>
    %82 = arith.mulf %81, %27 : vector<34x32xf32>
    %83 = arith.truncf %82 : vector<34x32xf32> to vector<34x32xbf16>
    %cst_43 = arith.constant dense<0.000000e+00> : vector<2x32xf32>
    %84 = tpu.matmul %7, %83, %cst_43 {dimension_numbers = #tpu.dot_dimension_numbers<[1], [0], [0], [1], [0, 0, 1, 1], [], []>} : vector<2x34xbf16>, vector<34x32xbf16>, vector<2x32xf32> -> vector<2x32xf32>
    %85 = arith.truncf %84 : vector<2x32xf32> to vector<2x32xbf16>
    %c0_44 = arith.constant 0 : index
    %c0_45 = arith.constant 0 : index
    %86 = vector.load %arg10[%c0_44, %c0_45] : memref<32x16xbf16, #tpu.memory_space<vmem>>, vector<32x16xbf16>
    %cst_46 = arith.constant dense<0.000000e+00> : vector<2x16xf32>
    %87 = tpu.matmul %85, %86, %cst_46 {dimension_numbers = #tpu.dot_dimension_numbers<[1], [0], [0], [1], [0, 0, 1, 1], [], []>} : vector<2x32xbf16>, vector<32x16xbf16>, vector<2x16xf32> -> vector<2x16xf32>
    %c0_47 = arith.constant 0 : index
    %c0_48 = arith.constant 0 : index
    %88 = vector.load %arg11[%c0_47, %c0_48] : memref<1x16xf32, #tpu.memory_space<vmem>>, vector<1x16xf32>
    %89 = vector.broadcast %88 : vector<1x16xf32> to vector<2x16xf32>
    %90 = arith.addf %87, %89 : vector<2x16xf32>
    %c0_49 = arith.constant 0 : index
    %c0_50 = arith.constant 0 : index
    %c0_51 = arith.constant 0 : index
    %91 = vector.load %arg12[%c0_49, %c0_50, %c0_51] : memref<1x2x16xf32, #tpu.memory_space<vmem>>, vector<1x2x16xf32>
    %92 = vector.shape_cast %91 : vector<1x2x16xf32> to vector<2x16xf32>
    %93 = vector.shape_cast %90 : vector<2x16xf32> to vector<1x2x16xf32>
    tpu.vector_store %arg12[%c0_49, %c0_50, %c0_51], %93 {strides = array<i32>} : memref<1x2x16xf32, #tpu.memory_space<vmem>>, vector<1x2x16xf32>,
    return
  }
  func.func @transform_0(%arg0: i32) -> (i32, i32, i32) {
    %c0_i32 = arith.constant 0 : i32
    %c0_i32_0 = arith.constant 0 : i32
    %c0_i32_1 = arith.constant 0 : i32
    return %arg0, %c0_i32, %c0_i32_0 : i32, i32, i32
  }
  func.func @transform_1(%arg0: i32) -> (i32, i32) {
    %c0_i32 = arith.constant 0 : i32
    %c0_i32_0 = arith.constant 0 : i32
    %c0_i32_1 = arith.constant 0 : i32
    return %c0_i32, %c0_i32_0 : i32, i32
  }
  func.func @transform_2(%arg0: i32) -> (i32, i32) {
    %c0_i32 = arith.constant 0 : i32
    %c0_i32_0 = arith.constant 0 : i32
    %c0_i32_1 = arith.constant 0 : i32
    return %c0_i32, %c0_i32_0 : i32, i32
  }
  func.func @transform_3(%arg0: i32) -> (i32, i32) {
    %c0_i32 = arith.constant 0 : i32
    %c0_i32_0 = arith.constant 0 : i32
    %c0_i32_1 = arith.constant 0 : i32
    return %c0_i32, %c0_i32_0 : i32, i32
  }
  func.func @transform_4(%arg0: i32) -> (i32, i32) {
    %c0_i32 = arith.constant 0 : i32
    %c0_i32_0 = arith.constant 0 : i32
    %c0_i32_1 = arith.constant 0 : i32
    return %c0_i32, %c0_i32_0 : i32, i32
  }
  func.func @transform_5(%arg0: i32) -> (i32, i32) {
    %c0_i32 = arith.constant 0 : i32
    %c0_i32_0 = arith.constant 0 : i32
    %c0_i32_1 = arith.constant 0 : i32
    return %c0_i32, %c0_i32_0 : i32, i32
  }
  func.func @transform_6(%arg0: i32) -> (i32, i32) {
    %c0_i32 = arith.constant 0 : i32
    %c0_i32_0 = arith.constant 0 : i32
    %c0_i32_1 = arith.constant 0 : i32
    return %c0_i32, %c0_i32_0 : i32, i32
  }
  func.func @transform_7(%arg0: i32) -> (i32, i32) {
    %c0_i32 = arith.constant 0 : i32
    %c0_i32_0 = arith.constant 0 : i32
    %c0_i32_1 = arith.constant 0 : i32
    return %c0_i32, %c0_i32_0 : i32, i32
  }
  func.func @transform_8(%arg0: i32) -> (i32, i32) {
    %c0_i32 = arith.constant 0 : i32
    %c0_i32_0 = arith.constant 0 : i32
    %c0_i32_1 = arith.constant 0 : i32
    return %c0_i32, %c0_i32_0 : i32, i32
  }
  func.func @transform_9(%arg0: i32) -> (i32, i32) {
    %c0_i32 = arith.constant 0 : i32
    %c0_i32_0 = arith.constant 0 : i32
    %c0_i32_1 = arith.constant 0 : i32
    return %c0_i32, %c0_i32_0 : i32, i32
  }
  func.func @transform_10(%arg0: i32) -> (i32, i32) {
    %c0_i32 = arith.constant 0 : i32
    %c0_i32_0 = arith.constant 0 : i32
    %c0_i32_1 = arith.constant 0 : i32
    return %c0_i32, %c0_i32_0 : i32, i32
  }
  func.func @transform_11(%arg0: i32) -> (i32, i32, i32) {
    %c0_i32 = arith.constant 0 : i32
    %c0_i32_0 = arith.constant 0 : i32
    %c0_i32_1 = arith.constant 0 : i32
    return %arg0, %c0_i32, %c0_i32_0 : i32, i32, i32
  }
}

</mosaic_0001>

<llo_original>
// kernel: tpu_custom_call.1
$region0: #{tpu_custom_call.1}
  #allocation0 [shape = 'u32[]', space=smem, size = 0x4, offset = 0x4, fixed_abs, tag = 'smem constant byte address 0x4 - core index']
  #allocation1 [shape = 'u32[144,128]{1,0:T(1,128)}', space=vmem, size = 0x12000, scoped, tag = 'internal scratch']
  #allocation2 [shape = 'bf16[34,32]{1,0:T(8,128)(2,1)}', space=vmem, size = 0x2800, scoped, tag = 'scratch operand']
  #allocation3 [shape = 'bf16[34,4]{1,0:T(8,128)(2,1)}', space=vmem, size = 0x2800, scoped, tag = 'scratch operand']
  %s0 = inlined_call_operand.vmem [shape: bf16[1,32,32], index: 0, kind: input, shape index: {}]
  %s1 = inlined_call_operand.vmem [shape: f32[32,32], index: 1, kind: input, shape index: {}]
  %s2 = inlined_call_operand.hbm [shape: f32[1,32], index: 2, kind: input, shape index: {}]
  %s3 = inlined_call_operand.hbm [shape: bf16[2,34], index: 3, kind: input, shape index: {}]
  %s4 = inlined_call_operand.vmem [shape: bf16[34,2], index: 4, kind: input, shape index: {}]
  %s5 = inlined_call_operand.vmem [shape: bf16[32,96], index: 5, kind: input, shape index: {}]
  %s6 = inlined_call_operand.vmem [shape: f32[1,96], index: 6, kind: input, shape index: {}]
  %s7 = inlined_call_operand.vmem [shape: bf16[32,4], index: 7, kind: input, shape index: {}]
  %s8 = inlined_call_operand.vmem [shape: bf16[4,32], index: 8, kind: input, shape index: {}]
  %s9 = inlined_call_operand.vmem [shape: bf16[32,16], index: 9, kind: input, shape index: {}]
  %s10 = inlined_call_operand.vmem [shape: f32[1,16], index: 10, kind: input, shape index: {}]
  %s11 = inlined_call_operand.hbm [shape: f32[1,2,16], index: 11, kind: output, shape index: {}]
  %s12 = sld [smem:[#allocation0]]
  $region62: #{tpu_custom_call.1} parent=0
    _
  %s14 = ssub.s32 1, %s12
  %s15 = scalar_select 0, %s14, %s12
  $region1: #{tpu_custom_call.1} parent=0
    #allocation4 [shape = 'u8[512]{0}', space=vmem, size = 0x400, scoped, tag = 'input window, operand 2, single buffered']
    #allocation5 [shape = 's32[1]{0}', space=sflag, size = 0x4, scoped, tag = 'scoped memory for tpu_custom_call.1']
    #allocation6 [shape = 's32[1]{0}', space=sflag, size = 0x4, scoped, tag = 'scoped memory for tpu_custom_call.1']
    #allocation7 [shape = 'u8[512]{0}', space=vmem, size = 0x400, scoped, tag = 'input window, operand 3, single buffered']
    #allocation8 [shape = 's32[1]{0}', space=sflag, size = 0x4, scoped, tag = 'scoped memory for tpu_custom_call.1']
    #allocation9 [shape = 'u8[1024]{0}', space=vmem, size = 0x400, scoped, tag = 'output window, operand 0, single buffered']
    %16 = vsyncpa [#allocation5], 0
    %17 = vsyncpa [#allocation8], 0
    %18 = vsyncpa [#allocation6], 0
    // Predicated region
    $region2: #{tpu_custom_call.1} parent=1 // pred_check
      _
    $region3: #{tpu_custom_call.1} parent=1 // pred_check_branch
      %20 = sbr.rel (0) target = $region5
    $region4: #{tpu_custom_call.1} parent=1 // pred_region
      _
    $region5: #{tpu_custom_call.1} parent=1 // pred_fallthru
      _
    // Predicated region
    $region6: #{tpu_custom_call.1} parent=1 // pred_check
      _
    $region7: #{tpu_custom_call.1} parent=1 // pred_check_branch
      %22 = sbr.rel (0) target = $region9
    $region8: #{tpu_custom_call.1} parent=1 // pred_region
      _
    $region9: #{tpu_custom_call.1} parent=1 // pred_fallthru
      _
    // Predicated region
    $region10: #{tpu_custom_call.1} parent=1 // pred_check
      _
    $region11: #{tpu_custom_call.1} parent=1 // pred_check_branch
      %24 = sbr.rel (0) target = $region13
    $region12: #{tpu_custom_call.1} parent=1 // pred_region
      %s26 = ssub.s32 16, 16
      %27 = vsyncadd [#allocation5], %s26
      %s29 = sshll.u32 [#allocation4], 4
      %s30 = int_to_ptr.vmem [resolvable:$true] %s29
      %32 = dma.hbm_to_vmem [thread:$0]  %s2, 16, %s30, [#allocation5]
    $region13: #{tpu_custom_call.1} parent=1 // pred_fallthru
      _
    // Predicated region
    $region14: #{tpu_custom_call.1} parent=1 // pred_check
      _
    $region15: #{tpu_custom_call.1} parent=1 // pred_check_branch
      %34 = sbr.rel (0) target = $region17
    $region16: #{tpu_custom_call.1} parent=1 // pred_region
      %s36 = ssub.s32 16, 16
      %37 = vsyncadd [#allocation8], %s36
      %s39 = sshll.u32 [#allocation7], 4
      %s40 = int_to_ptr.vmem [resolvable:$true] %s39
      %42 = dma.hbm_to_vmem [thread:$0]  %s3, 16, %s40, [#allocation8]
    $region17: #{tpu_custom_call.1} parent=1 // pred_fallthru
      _
    // Predicated region
    $region18: #{tpu_custom_call.1} parent=1 // pred_check
      _
    $region19: #{tpu_custom_call.1} parent=1 // pred_check_branch
      %44 = sbr.rel (0) target = $region21
    $region20: #{tpu_custom_call.1} parent=1 // pred_region
      _
    $region21: #{tpu_custom_call.1} parent=1 // pred_fallthru
      _
    // Predicated region
    $region22: #{tpu_custom_call.1} parent=1 // pred_check
      _
    $region23: #{tpu_custom_call.1} parent=1 // pred_check_branch
      %46 = sbr.rel (0) target = $region25
    $region24: #{tpu_custom_call.1} parent=1 // pred_region
      _
    $region25: #{tpu_custom_call.1} parent=1 // pred_fallthru
      _
    // Predicated region
    $region26: #{tpu_custom_call.1} parent=1 // pred_check
      _
    $region27: #{tpu_custom_call.1} parent=1 // pred_check_branch
      %48 = sbr.rel (0) target = $region29
    $region28: #{tpu_custom_call.1} parent=1 // pred_region
      _
    $region29: #{tpu_custom_call.1} parent=1 // pred_fallthru
      _
    // Predicated region
    $region30: #{tpu_custom_call.1} parent=1 // pred_check
      _
    $region31: #{tpu_custom_call.1} parent=1 // pred_check_branch
      %50 = sbr.rel (0) target = $region33
    $region32: #{tpu_custom_call.1} parent=1 // pred_region
      _
    $region33: #{tpu_custom_call.1} parent=1 // pred_fallthru
      _
    // Predicated region
    $region34: #{tpu_custom_call.1} parent=1 // pred_check
      _
    $region35: #{tpu_custom_call.1} parent=1 // pred_check_branch
      %52 = sbr.rel (0) target = $region37
    $region36: #{tpu_custom_call.1} parent=1 // pred_region
      _
    $region37: #{tpu_custom_call.1} parent=1 // pred_fallthru
      _
    // Predicated region
    $region38: #{tpu_custom_call.1} parent=1 // pred_check
      _
    $region39: #{tpu_custom_call.1} parent=1 // pred_check_branch
      %54 = sbr.rel (0) target = $region41
    $region40: #{tpu_custom_call.1} parent=1 // pred_region
      _
    $region41: #{tpu_custom_call.1} parent=1 // pred_fallthru
      _
    // Predicated region
    $region42: #{tpu_custom_call.1} parent=1 // pred_check
      _
    $region43: #{tpu_custom_call.1} parent=1 // pred_check_branch
      %56 = sbr.rel (0) target = $region45
    $region44: #{tpu_custom_call.1} parent=1 // pred_region
      _
    $region45: #{tpu_custom_call.1} parent=1 // pred_fallthru
      _
    // Predicated region
    $region46: #{tpu_custom_call.1} parent=1 // pred_check
      _
    $region47: #{tpu_custom_call.1} parent=1 // pred_check_branch
      %58 = sbr.rel (0) target = $region49
    $region48: #{tpu_custom_call.1} parent=1 // pred_region
      %59 = dma.done [#allocation5], 16
    $region49: #{tpu_custom_call.1} parent=1 // pred_fallthru
      _
    // Predicated region
    $region50: #{tpu_custom_call.1} parent=1 // pred_check
      _
    $region51: #{tpu_custom_call.1} parent=1 // pred_check_branch
      %61 = sbr.rel (0) target = $region53
    $region52: #{tpu_custom_call.1} parent=1 // pred_region
      %62 = dma.done [#allocation8], 16
    $region53: #{tpu_custom_call.1} parent=1 // pred_fallthru
      _
    %v64 = vld [vmem:[%s0] sm:$0xf]
    %v65 = vld [vmem:[%s0 + $0x4] sm:$0xf]
    %v66 = vld [vmem:[%s0 + $0x8] sm:$0xf]
    %v67 = vld [vmem:[%s0 + $0xc] sm:$0xf]
    %v68 = vunpack.c.l.bf16 %v64
    %v69 = vunpack.c.l.bf16 %v65
    %v70 = vunpack.c.l.bf16 %v66
    %v71 = vunpack.c.l.bf16 %v67
    %v72 = vld [vmem:[%s1] sm:$0xff]
    %v73 = vld [vmem:[%s1 + $0x8] sm:$0xff]
    %v74 = vld [vmem:[%s1 + $0x10] sm:$0xff]
    %v75 = vld [vmem:[%s1 + $0x18] sm:$0xff]
    %v76 = vadd.f32 %v68, %v72
    %v77 = vadd.f32 %v69, %v73
    %v78 = vadd.f32 %v70, %v74
    %v79 = vadd.f32 %v71, %v75
    %v80 = vpack.c.bf16 %v77, %v76
    %v81 = vpack.c.bf16 %v79, %v78
    %v84 = vunpack.c.l.b16 %v80
    %v85 = vunpack.c.h.b16 %v80
    %v86 = vunpack.c.l.b16 %v81
    %v87 = vunpack.c.h.b16 %v81
    %v88 = vpack.c.b16 %v84, %v84
    %v89 = vpack.c.b16 %v85, %v85
    %v90 = vpack.c.b16 %v86, %v86
    %v91 = vpack.c.b16 %v87, %v87
    %vm96 = vcmask 257024
    %97 = vst.msk [vmem:[#allocation2] sm:$0xf] %vm96, %v88
    %98 = vst.msk [vmem:[#allocation2 + $0x4] sm:$0xf] %vm96, %v89
    %99 = vst.msk [vmem:[#allocation2 + $0x8] sm:$0xf] %vm96, %v90
    %100 = vst.msk [vmem:[#allocation2 + $0xc] sm:$0xf] %vm96, %v91
    %v101 = vld [vmem:[#allocation7] sm:$0x1]
    %v106 = vunpack.c.l.b16 %v64
    %v107 = vunpack.c.l.b16 %v65
    %v108 = vunpack.c.l.b16 %v66
    %v109 = vunpack.c.l.b16 %v67
    %v110 = vpack.c.b16 %v107, %v106
    %v111 = vpack.c.b16 %v109, %v108
    %vm114 = vcmask 261120
    %v116 = vsel %vm114, %v101, 0
    %118 = vmatprep.subr.bf16.mxu0 0
    %119 = vmatpush1.bf16.msra.mxu0 %v110
    %120 = vmatprep.subr.bf16.mxu0 0
    %121 = vmatpush1.bf16.msra.mxu0 %v111
    %122 = vmatprep.subr.bf16.mxu0 0
    %123 = vmatpush1.bf16.msra.mxu0 0
    %124 = vmatprep.subr.bf16.mxu0 0
    %125 = vmatpush1.bf16.msra.mxu0 0
    %126 = vmatprep.subr.bf16.mxu0 0
    %127 = vmatpush1.bf16.msra.mxu0 0
    %128 = vmatprep.subr.bf16.mxu0 0
    %129 = vmatpush1.bf16.msra.mxu0 0
    %130 = vmatprep.subr.bf16.mxu0 0
    %131 = vmatpush1.bf16.msra.mxu0 0
    %132 = vmatprep.subr.bf16.mxu0 0
    %133 = vmatpush1.bf16.msra.mxu0 0
    %134 = vmatprep.subr.bf16.mxu0 0
    %135 = vmatpush1.bf16.msra.mxu0 0
    %136 = vmatprep.subr.bf16.mxu0 0
    %137 = vmatpush1.bf16.msra.mxu0 0
    %138 = vmatprep.subr.bf16.mxu0 0
    %139 = vmatpush1.bf16.msra.mxu0 0
    %140 = vmatprep.subr.bf16.mxu0 0
    %141 = vmatpush1.bf16.msra.mxu0 0
    %142 = vmatprep.subr.bf16.mxu0 0
    %143 = vmatpush1.bf16.msra.mxu0 0
    %144 = vmatprep.subr.bf16.mxu0 0
    %145 = vmatpush1.bf16.msra.mxu0 0
    %146 = vmatprep.subr.bf16.mxu0 0
    %147 = vmatpush1.bf16.msra.mxu0 0
    %148 = vmatprep.subr.bf16.mxu0 0
    %149 = vmatpush1.bf16.msra.mxu0 0
    %150 = vmatprep.mubr.bf16.mxu0 0
    %151 = vmatmul.mubr.bf16.gmra.mrb[0].mxu0 %v116
    %v152 = vpop.f32.mrb[0].mxu0
    %v153 = vadd.f32 0.0, %v152
    %v154 = vpop.f32.mrb[0].mxu0
    %v155 = vpop.f32.mrb[0].mxu0
    %v156 = vpop.f32.mrb[0].mxu0
    %157 = vdwg.mxu0
    %v158 = vmul.f32 %v153, 0.0625
    %v159 = vld [vmem:[#allocation4] sm:$0x1]
    %v161 = vlaneseq
    %v162 = vshrl.u32 %v161, 7
    %v163 = vsub.s32 0, %v162
    %v164 = vrot.slane %v159, %v163
    %v166 = vadd.f32 %v158, %v164
    %v167 = vpack.c.bf16 %v166, %v166
    %vm168 = vcmask 253952
    %169 = vst.msk [vmem:[#allocation2 + $0x10] sm:$0x1] %vm168, %v167
    %v170 = vld [vmem:[#allocation2] sm:$0xf]
    %v171 = vld [vmem:[#allocation2 + $0x4] sm:$0xf]
    %v172 = vld [vmem:[#allocation2 + $0x8] sm:$0xf]
    %v173 = vld [vmem:[#allocation2 + $0xc] sm:$0xf]
    %v174 = vld [vmem:[#allocation2 + $0x10] sm:$0x1]
    %v175 = vld [vmem:[%s5] sm:$0xf]
    %v176 = vld [vmem:[%s5 + $0x4] sm:$0xf]
    %v177 = vld [vmem:[%s5 + $0x8] sm:$0xf]
    %v178 = vld [vmem:[%s5 + $0xc] sm:$0xf]
    %v179 = vld [vmem:[%s6] sm:$0x1]
    %v181 = vlaneseq
    %v182 = vshrl.u32 %v181, 7
    %v183 = vsub.s32 0, %v182
    %v184 = vrot.slane %v179, %v183
    %v191 = vunpack.c.l.b16 %v170
    %v192 = vunpack.c.l.b16 %v171
    %v193 = vunpack.c.l.b16 %v172
    %v194 = vunpack.c.l.b16 %v173
    %v195 = vunpack.c.l.b16 %v174
    %v196 = vpack.c.b16 %v192, %v191
    %v197 = vpack.c.b16 %v194, %v193
    %v198 = vpack.c.b16 %v195, %v195
    %v203 = vunpack.c.l.b16 %v175
    %v204 = vunpack.c.l.b16 %v176
    %v205 = vunpack.c.l.b16 %v177
    %v206 = vunpack.c.l.b16 %v178
    %v207 = vpack.c.b16 %v204, %v203
    %v208 = vpack.c.b16 %v206, %v205
    %v212 = vsel %vm114, %v196, 0
    %v215 = vsel %vm114, %v197, 0
    %v218 = vsel %vm114, %v198, 0
    %220 = vmatprep.subr.bf16.mxu0 0
    %221 = vmatpush1.bf16.msra.mxu0 %v207
    %222 = vmatprep.subr.bf16.mxu0 0
    %223 = vmatpush1.bf16.msra.mxu0 %v208
    %224 = vmatprep.subr.bf16.mxu0 0
    %225 = vmatpush1.bf16.msra.mxu0 0
    %226 = vmatprep.subr.bf16.mxu0 0
    %227 = vmatpush1.bf16.msra.mxu0 0
    %228 = vmatprep.subr.bf16.mxu0 0
    %229 = vmatpush1.bf16.msra.mxu0 0
    %230 = vmatprep.subr.bf16.mxu0 0
    %231 = vmatpush1.bf16.msra.mxu0 0
    %232 = vmatprep.subr.bf16.mxu0 0
    %233 = vmatpush1.bf16.msra.mxu0 0
    %234 = vmatprep.subr.bf16.mxu0 0
    %235 = vmatpush1.bf16.msra.mxu0 0
    %236 = vmatprep.subr.bf16.mxu0 0
    %237 = vmatpush1.bf16.msra.mxu0 0
    %238 = vmatprep.subr.bf16.mxu0 0
    %239 = vmatpush1.bf16.msra.mxu0 0
    %240 = vmatprep.subr.bf16.mxu0 0
    %241 = vmatpush1.bf16.msra.mxu0 0
    %242 = vmatprep.subr.bf16.mxu0 0
    %243 = vmatpush1.bf16.msra.mxu0 0
    %244 = vmatprep.subr.bf16.mxu0 0
    %245 = vmatpush1.bf16.msra.mxu0 0
    %246 = vmatprep.subr.bf16.mxu0 0
    %247 = vmatpush1.bf16.msra.mxu0 0
    %248 = vmatprep.subr.bf16.mxu0 0
    %249 = vmatpush1.bf16.msra.mxu0 0
    %250 = vmatprep.subr.bf16.mxu0 0
    %251 = vmatpush1.bf16.msra.mxu0 0
    %252 = vmatprep.mubr.bf16.mxu0 0
    %253 = vmatmul.mubr.bf16.gmra.mrb[0].mxu0 %v212
    %v254 = vpop.f32.mrb[0].mxu0
    %v255 = vadd.f32 %v184, %v254
    %v256 = vpop.f32.mrb[0].mxu0
    %v257 = vpop.f32.mrb[0].mxu0
    %v258 = vadd.f32 %v184, %v257
    %v259 = vpop.f32.mrb[0].mxu0
    %260 = vmatprep.mubr.bf16.mxu0 0
    %261 = vmatmul.mubr.bf16.gmra.mrb[0].mxu0 %v215
    %v262 = vpop.f32.mrb[0].mxu0
    %v263 = vadd.f32 %v184, %v262
    %v264 = vpop.f32.mrb[0].mxu0
    %v265 = vpop.f32.mrb[0].mxu0
    %v266 = vadd.f32 %v184, %v265
    %v267 = vpop.f32.mrb[0].mxu0
    %268 = vmatprep.mubr.bf16.mxu0 0
    %269 = vmatmul.mubr.bf16.gmra.mrb[0].mxu0 %v218
    %v270 = vpop.f32.mrb[0].mxu0
    %v271 = vadd.f32 %v184, %v270
    %v272 = vpop.f32.mrb[0].mxu0
    %v273 = vpop.f32.mrb[0].mxu0
    %v274 = vpop.f32.mrb[0].mxu0
    %275 = vdwg.mxu0
    %v276 = vmul.f32 %v271, 0.35355338
    %v277 = vld [vmem:[%s4] sm:$0xf]
    %v278 = vld [vmem:[%s4 + $0x4] sm:$0xf]
    %v279 = vld [vmem:[%s4 + $0x8] sm:$0xf]
    %v280 = vld [vmem:[%s4 + $0xc] sm:$0xf]
    %v281 = vld [vmem:[%s4 + $0x10] sm:$0x1]
    %v282 = vpack.c.bf16 %v276, %v276
    %v288 = vunpack.c.l.b16 %v277
    %v289 = vunpack.c.l.b16 %v278
    %v290 = vunpack.c.l.b16 %v279
    %v291 = vunpack.c.l.b16 %v280
    %v292 = vunpack.c.l.b16 %v281
    %v293 = vpack.c.b16 %v289, %v288
    %v294 = vpack.c.b16 %v291, %v290
    %v295 = vpack.c.b16 %v292, %v292
    %vm296 = vcmask 15360
    %v298 = vsel %vm296, %v293, 0
    %v301 = vsel %vm296, %v294, 0
    %v304 = vsel %vm296, %v295, 0
    %vm306 = vcmask 1040384
    %v308 = vsel %vm306, %v282, 0
    %310 = vmatprep.subr.bf16.mxu0 0
    %311 = vmatpush1.bf16.msra.mxu0 %v308
    %312 = vmatprep.subr.bf16.mxu0 0
    %313 = vmatpush1.bf16.msra.mxu0 0
    %314 = vmatprep.subr.bf16.mxu0 0
    %315 = vmatpush1.bf16.msra.mxu0 0
    %316 = vmatprep.subr.bf16.mxu0 0
    %317 = vmatpush1.bf16.msra.mxu0 0
    %318 = vmatprep.subr.bf16.mxu0 0
    %319 = vmatpush1.bf16.msra.mxu0 0
    %320 = vmatprep.subr.bf16.mxu0 0
    %321 = vmatpush1.bf16.msra.mxu0 0
    %322 = vmatprep.subr.bf16.mxu0 0
    %323 = vmatpush1.bf16.msra.mxu0 0
    %324 = vmatprep.subr.bf16.mxu0 0
    %325 = vmatpush1.bf16.msra.mxu0 0
    %326 = vmatprep.subr.bf16.mxu0 0
    %327 = vmatpush1.bf16.msra.mxu0 0
    %328 = vmatprep.subr.bf16.mxu0 0
    %329 = vmatpush1.bf16.msra.mxu0 0
    %330 = vmatprep.subr.bf16.mxu0 0
    %331 = vmatpush1.bf16.msra.mxu0 0
    %332 = vmatprep.subr.bf16.mxu0 0
    %333 = vmatpush1.bf16.msra.mxu0 0
    %334 = vmatprep.subr.bf16.mxu0 0
    %335 = vmatpush1.bf16.msra.mxu0 0
    %336 = vmatprep.subr.bf16.mxu0 0
    %337 = vmatpush1.bf16.msra.mxu0 0
    %338 = vmatprep.subr.bf16.mxu0 0
    %339 = vmatpush1.bf16.msra.mxu0 0
    %340 = vmatprep.subr.bf16.mxu0 0
    %341 = vmatpush1.bf16.msra.mxu0 0
    %342 = vmatprep.mubr.bf16.mxu0 0
    %343 = vmatmul.mubr.bf16.gmra.mrb[0].mxu0 %v298
    %v344 = vpop.f32.mrb[0].mxu0
    %v345 = vadd.f32 0.0, %v344
    %v346 = vpop.f32.mrb[0].mxu0
    %v347 = vpop.f32.mrb[0].mxu0
    %v348 = vadd.f32 0.0, %v347
    %v349 = vpop.f32.mrb[0].mxu0
    %350 = vmatprep.mubr.bf16.mxu0 0
    %351 = vmatmul.mubr.bf16.gmra.mrb[0].mxu0 %v301
    %v352 = vpop.f32.mrb[0].mxu0
    %v353 = vadd.f32 0.0, %v352
    %v354 = vpop.f32.mrb[0].mxu0
    %v355 = vpop.f32.mrb[0].mxu0
    %v356 = vadd.f32 0.0, %v355
    %v357 = vpop.f32.mrb[0].mxu0
    %358 = vmatprep.mubr.bf16.mxu0 0
    %359 = vmatmul.mubr.bf16.gmra.mrb[0].mxu0 %v304
    %v360 = vpop.f32.mrb[0].mxu0
    %v361 = vadd.f32 0.0, %v360
    %v362 = vpop.f32.mrb[0].mxu0
    %v363 = vpop.f32.mrb[0].mxu0
    %v364 = vpop.f32.mrb[0].mxu0
    %365 = vdwg.mxu0
    %371 = vrot.lane.b32.xlu0 %v255, 96
    %v372 = vpop.permute.xlu0 %371
    %373 = vrot.lane.b32.xlu0 %v258, 96
    %v374 = vpop.permute.xlu0 %373
    %375 = vrot.lane.b32.xlu0 %v263, 96
    %v376 = vpop.permute.xlu0 %375
    %377 = vrot.lane.b32.xlu0 %v266, 96
    %v378 = vpop.permute.xlu0 %377
    %379 = vrot.lane.b32.xlu0 %v271, 96
    %v380 = vpop.permute.xlu0 %379
    %v386 = vmul.f32 %v345, %v372
    %v387 = vmul.f32 %v348, %v374
    %v388 = vmul.f32 %v353, %v376
    %v389 = vmul.f32 %v356, %v378
    %v390 = vmul.f32 %v361, %v380
    %v391 = vpack.c.bf16 %v387, %v386
    %v392 = vpack.c.bf16 %v389, %v388
    %v393 = vpack.c.bf16 %v390, %v390
    %v394 = vld [vmem:[%s7] sm:$0xf]
    %v395 = vld [vmem:[%s7 + $0x4] sm:$0xf]
    %v396 = vld [vmem:[%s7 + $0x8] sm:$0xf]
    %v397 = vld [vmem:[%s7 + $0xc] sm:$0xf]
    %v402 = vunpack.c.l.b16 %v394
    %v403 = vunpack.c.l.b16 %v395
    %v404 = vunpack.c.l.b16 %v396
    %v405 = vunpack.c.l.b16 %v397
    %v406 = vpack.c.b16 %v403, %v402
    %v407 = vpack.c.b16 %v405, %v404
    %v411 = vsel %vm114, %v391, 0
    %v414 = vsel %vm114, %v392, 0
    %v417 = vsel %vm114, %v393, 0
    %419 = vmatprep.subr.bf16.mxu0 0
    %420 = vmatpush1.bf16.msra.mxu0 %v406
    %421 = vmatprep.subr.bf16.mxu0 0
    %422 = vmatpush1.bf16.msra.mxu0 %v407
    %423 = vmatprep.subr.bf16.mxu0 0
    %424 = vmatpush1.bf16.msra.mxu0 0
    %425 = vmatprep.subr.bf16.mxu0 0
    %426 = vmatpush1.bf16.msra.mxu0 0
    %427 = vmatprep.subr.bf16.mxu0 0
    %428 = vmatpush1.bf16.msra.mxu0 0
    %429 = vmatprep.subr.bf16.mxu0 0
    %430 = vmatpush1.bf16.msra.mxu0 0
    %431 = vmatprep.subr.bf16.mxu0 0
    %432 = vmatpush1.bf16.msra.mxu0 0
    %433 = vmatprep.subr.bf16.mxu0 0
    %434 = vmatpush1.bf16.msra.mxu0 0
    %435 = vmatprep.subr.bf16.mxu0 0
    %436 = vmatpush1.bf16.msra.mxu0 0
    %437 = vmatprep.subr.bf16.mxu0 0
    %438 = vmatpush1.bf16.msra.mxu0 0
    %439 = vmatprep.subr.bf16.mxu0 0
    %440 = vmatpush1.bf16.msra.mxu0 0
    %441 = vmatprep.subr.bf16.mxu0 0
    %442 = vmatpush1.bf16.msra.mxu0 0
    %443 = vmatprep.subr.bf16.mxu0 0
    %444 = vmatpush1.bf16.msra.mxu0 0
    %445 = vmatprep.subr.bf16.mxu0 0
    %446 = vmatpush1.bf16.msra.mxu0 0
    %447 = vmatprep.subr.bf16.mxu0 0
    %448 = vmatpush1.bf16.msra.mxu0 0
    %449 = vmatprep.subr.bf16.mxu0 0
    %450 = vmatpush1.bf16.msra.mxu0 0
    %451 = vmatprep.mubr.bf16.mxu0 0
    %452 = vmatmul.mubr.bf16.gmra.mrb[0].mxu0 %v411
    %v453 = vpop.f32.mrb[0].mxu0
    %v454 = vadd.f32 0.0, %v453
    %v455 = vpop.f32.mrb[0].mxu0
    %v456 = vpop.f32.mrb[0].mxu0
    %v457 = vadd.f32 0.0, %v456
    %v458 = vpop.f32.mrb[0].mxu0
    %459 = vmatprep.mubr.bf16.mxu0 0
    %460 = vmatmul.mubr.bf16.gmra.mrb[0].mxu0 %v414
    %v461 = vpop.f32.mrb[0].mxu0
    %v462 = vadd.f32 0.0, %v461
    %v463 = vpop.f32.mrb[0].mxu0
    %v464 = vpop.f32.mrb[0].mxu0
    %v465 = vadd.f32 0.0, %v464
    %v466 = vpop.f32.mrb[0].mxu0
    %467 = vmatprep.mubr.bf16.mxu0 0
    %468 = vmatmul.mubr.bf16.gmra.mrb[0].mxu0 %v417
    %v469 = vpop.f32.mrb[0].mxu0
    %v470 = vadd.f32 0.0, %v469
    %v471 = vpop.f32.mrb[0].mxu0
    %v472 = vpop.f32.mrb[0].mxu0
    %v473 = vpop.f32.mrb[0].mxu0
    %474 = vdwg.mxu0
    %vm475 = vcmask 31744
    %v476 = vsel %vm475, %v454, -inf
    %v477 = vsel %vm475, %v457, -inf
    %v478 = vmax.f32 %v476, %v477
    %v479 = vrot.slane %v478, 4
    %v480 = vmax.f32 %v478, %v479
    %v481 = vrot.slane %v480, 2
    %v482 = vmax.f32 %v480, %v481
    %v483 = vrot.slane %v482, 1
    %v484 = vmax.f32 %v482, %v483
    %v485 = vmax.f32 %v484, %v470
    %v486 = vlaneseq
    %v487 = vshrl.u32 %v486, 7
    %v488 = vsub.s32 0, %v487
    %v489 = vrot.slane %v485, %v488
    %v490 = vsub.f32 %v454, %v489
    %v491 = vsub.f32 %v457, %v489
    %v492 = vmul.f32 %v490, 1.442695
    %v493 = vpow.pop %v492
    %v494 = vmul.f32 %v491, 1.442695
    %v495 = vpow.pop %v494
    %v496 = vsub.f32 %v470, %v485
    %v497 = vmul.f32 %v496, 1.442695
    %v498 = vpow.pop %v497
    %v499 = vsel %vm475, %v493, 0.0
    %v500 = vsel %vm475, %v495, 0.0
    %v501 = vadd.f32 %v499, %v500
    %v502 = vrot.slane %v501, 4
    %v503 = vadd.f32 %v501, %v502
    %v504 = vrot.slane %v503, 2
    %v505 = vadd.f32 %v503, %v504
    %v506 = vrot.slane %v505, 1
    %v507 = vadd.f32 %v505, %v506
    %v508 = vadd.f32 %v507, %v498
    %v509 = vrcp.pop %v508
    %v510 = vmul.f32 1.0, %v509
    %v511 = vlaneseq
    %v512 = vshrl.u32 %v511, 7
    %v513 = vsub.s32 0, %v512
    %v514 = vrot.slane %v510, %v513
    %v515 = vmul.f32 %v493, %v514
    %v516 = vmul.f32 %v495, %v514
    %v517 = vpack.c.bf16 %v516, %v515
    %v519 = vunpack.c.l.b16 %v517
    %v520 = vunpack.c.h.b16 %v517
    %v521 = vpack.c.b16 %v519, %v519
    %v522 = vpack.c.b16 %v520, %v520
    %vm525 = vcmask 27648
    %526 = vst.msk [vmem:[#allocation3] sm:$0xf] %vm525, %v521
    %527 = vst.msk [vmem:[#allocation3 + $0x4] sm:$0xf] %vm525, %v522
    %v528 = vmul.f32 %v498, %v510
    %v529 = vpack.c.bf16 %v528, %v528
    %vm530 = vcmask 24576
    %vm531 = vsmask.f32 256
    %vm532 = vmand %vm530, %vm531
    %v533 = vld [vmem:[#allocation3 + $0x10] sm:$0x1]
    %v534 = vsel %vm532, %v529, %v533
    %535 = vst [vmem:[#allocation3 + $0x10] sm:$0x1] %v534
    %v536 = vsel %vm475, %v462, -inf
    %v537 = vsel %vm475, %v465, -inf
    %v538 = vmax.f32 %v536, %v537
    %v539 = vrot.slane %v538, 4
    %v540 = vmax.f32 %v538, %v539
    %v541 = vrot.slane %v540, 2
    %v542 = vmax.f32 %v540, %v541
    %v543 = vrot.slane %v542, 1
    %v544 = vmax.f32 %v542, %v543
    %v545 = vmax.f32 %v544, %v470
    %v546 = vlaneseq
    %v547 = vshrl.u32 %v546, 7
    %v548 = vsub.s32 1, %v547
    %v549 = vrot.slane %v545, %v548
    %v550 = vsub.f32 %v462, %v549
    %v551 = vsub.f32 %v465, %v549
    %v552 = vmul.f32 %v550, 1.442695
    %v553 = vpow.pop %v552
    %v554 = vmul.f32 %v551, 1.442695
    %v555 = vpow.pop %v554
    %v556 = vsub.f32 %v470, %v545
    %v557 = vmul.f32 %v556, 1.442695
    %v558 = vpow.pop %v557
    %v559 = vsel %vm475, %v553, 0.0
    %v560 = vsel %vm475, %v555, 0.0
    %v561 = vadd.f32 %v559, %v560
    %v562 = vrot.slane %v561, 4
    %v563 = vadd.f32 %v561, %v562
    %v564 = vrot.slane %v563, 2
    %v565 = vadd.f32 %v563, %v564
    %v566 = vrot.slane %v565, 1
    %v567 = vadd.f32 %v565, %v566
    %v568 = vadd.f32 %v567, %v558
    %v569 = vrcp.pop %v568
    %v570 = vmul.f32 1.0, %v569
    %v571 = vlaneseq
    %v572 = vshrl.u32 %v571, 7
    %v573 = vsub.s32 1, %v572
    %v574 = vrot.slane %v570, %v573
    %v575 = vmul.f32 %v553, %v574
    %v576 = vmul.f32 %v555, %v574
    %v577 = vpack.c.bf16 %v576, %v575
    %v579 = vunpack.c.l.b16 %v577
    %v580 = vunpack.c.h.b16 %v577
    %v581 = vpack.c.b16 %v579, %v579
    %v582 = vpack.c.b16 %v580, %v580
    %585 = vst.msk [vmem:[#allocation3 + $0x8] sm:$0xf] %vm525, %v581
    %586 = vst.msk [vmem:[#allocation3 + $0xc] sm:$0xf] %vm525, %v582
    %v587 = vmul.f32 %v558, %v570
    %v588 = vpack.c.bf16 %v587, %v587
    %vm589 = vsmask.f32 7938
    %vm590 = vmand %vm530, %vm589
    %v591 = vld [vmem:[#allocation3 + $0x10] sm:$0x1]
    %v592 = vsel %vm590, %v588, %v591
    %593 = vst [vmem:[#allocation3 + $0x10] sm:$0x1] %v592
    %v594 = vld [vmem:[#allocation3] sm:$0xf]
    %v595 = vld [vmem:[#allocation3 + $0x4] sm:$0xf]
    %v596 = vld [vmem:[#allocation3 + $0x8] sm:$0xf]
    %v597 = vld [vmem:[#allocation3 + $0xc] sm:$0xf]
    %v598 = vld [vmem:[#allocation3 + $0x10] sm:$0x1]
    %v599 = vld [vmem:[%s8] sm:$0x3]
    %v605 = vunpack.c.l.b16 %v594
    %v606 = vunpack.c.l.b16 %v595
    %v607 = vunpack.c.l.b16 %v596
    %v608 = vunpack.c.l.b16 %v597
    %v609 = vunpack.c.l.b16 %v598
    %v610 = vpack.c.b16 %v606, %v605
    %v611 = vpack.c.b16 %v608, %v607
    %v612 = vpack.c.b16 %v609, %v609
    %v614 = vsel %vm475, %v610, 0
    %v617 = vsel %vm475, %v611, 0
    %v620 = vsel %vm475, %v612, 0
    %vm622 = vcmask 1041408
    %v624 = vsel %vm622, %v599, 0
    %626 = vmatprep.subr.bf16.mxu0 0
    %627 = vmatpush1.bf16.msra.mxu0 %v624
    %628 = vmatprep.subr.bf16.mxu0 0
    %629 = vmatpush1.bf16.msra.mxu0 0
    %630 = vmatprep.subr.bf16.mxu0 0
    %631 = vmatpush1.bf16.msra.mxu0 0
    %632 = vmatprep.subr.bf16.mxu0 0
    %633 = vmatpush1.bf16.msra.mxu0 0
    %634 = vmatprep.subr.bf16.mxu0 0
    %635 = vmatpush1.bf16.msra.mxu0 0
    %636 = vmatprep.subr.bf16.mxu0 0
    %637 = vmatpush1.bf16.msra.mxu0 0
    %638 = vmatprep.subr.bf16.mxu0 0
    %639 = vmatpush1.bf16.msra.mxu0 0
    %640 = vmatprep.subr.bf16.mxu0 0
    %641 = vmatpush1.bf16.msra.mxu0 0
    %642 = vmatprep.subr.bf16.mxu0 0
    %643 = vmatpush1.bf16.msra.mxu0 0
    %644 = vmatprep.subr.bf16.mxu0 0
    %645 = vmatpush1.bf16.msra.mxu0 0
    %646 = vmatprep.subr.bf16.mxu0 0
    %647 = vmatpush1.bf16.msra.mxu0 0
    %648 = vmatprep.subr.bf16.mxu0 0
    %649 = vmatpush1.bf16.msra.mxu0 0
    %650 = vmatprep.subr.bf16.mxu0 0
    %651 = vmatpush1.bf16.msra.mxu0 0
    %652 = vmatprep.subr.bf16.mxu0 0
    %653 = vmatpush1.bf16.msra.mxu0 0
    %654 = vmatprep.subr.bf16.mxu0 0
    %655 = vmatpush1.bf16.msra.mxu0 0
    %656 = vmatprep.subr.bf16.mxu0 0
    %657 = vmatpush1.bf16.msra.mxu0 0
    %658 = vmatprep.mubr.bf16.mxu0 0
    %659 = vmatmul.mubr.bf16.gmra.mrb[0].mxu0 %v614
    %v660 = vpop.f32.mrb[0].mxu0
    %v661 = vadd.f32 0.0, %v660
    %v662 = vpop.f32.mrb[0].mxu0
    %v663 = vpop.f32.mrb[0].mxu0
    %v664 = vadd.f32 0.0, %v663
    %v665 = vpop.f32.mrb[0].mxu0
    %666 = vmatprep.mubr.bf16.mxu0 0
    %667 = vmatmul.mubr.bf16.gmra.mrb[0].mxu0 %v617
    %v668 = vpop.f32.mrb[0].mxu0
    %v669 = vadd.f32 0.0, %v668
    %v670 = vpop.f32.mrb[0].mxu0
    %v671 = vpop.f32.mrb[0].mxu0
    %v672 = vadd.f32 0.0, %v671
    %v673 = vpop.f32.mrb[0].mxu0
    %674 = vmatprep.mubr.bf16.mxu0 0
    %675 = vmatmul.mubr.bf16.gmra.mrb[0].mxu0 %v620
    %v676 = vpop.f32.mrb[0].mxu0
    %v677 = vadd.f32 0.0, %v676
    %v678 = vpop.f32.mrb[0].mxu0
    %v679 = vpop.f32.mrb[0].mxu0
    %v680 = vpop.f32.mrb[0].mxu0
    %681 = vdwg.mxu0
    %682 = vrot.lane.b32.xlu0 %v255, 64
    %v683 = vpop.permute.xlu0 %682
    %684 = vrot.lane.b32.xlu0 %v258, 64
    %v685 = vpop.permute.xlu0 %684
    %686 = vrot.lane.b32.xlu0 %v263, 64
    %v687 = vpop.permute.xlu0 %686
    %688 = vrot.lane.b32.xlu0 %v266, 64
    %v689 = vpop.permute.xlu0 %688
    %690 = vrot.lane.b32.xlu0 %v271, 64
    %v691 = vpop.permute.xlu0 %690
    %v697 = vmul.f32 %v661, %v683
    %v698 = vmul.f32 %v664, %v685
    %v699 = vmul.f32 %v669, %v687
    %v700 = vmul.f32 %v672, %v689
    %v701 = vmul.f32 %v677, %v691
    %v702 = vpack.c.bf16 %v698, %v697
    %v703 = vpack.c.bf16 %v700, %v699
    %v704 = vpack.c.bf16 %v701, %v701
    %vm705 = vcmask 277504
    %v706 = vsel %vm705, %v101, 0
    %v709 = vsel %vm306, %v704, 0
    %711 = vmatprep.subr.bf16.mxu0 0
    %712 = vmatpush1.bf16.msra.mxu0 %v702
    %713 = vmatprep.subr.bf16.mxu0 0
    %714 = vmatpush1.bf16.msra.mxu0 %v703
    %715 = vmatprep.subr.bf16.mxu0 0
    %716 = vmatpush1.bf16.msra.mxu0 %v709
    %717 = vmatprep.subr.bf16.mxu0 0
    %718 = vmatpush1.bf16.msra.mxu0 0
    %719 = vmatprep.subr.bf16.mxu0 0
    %720 = vmatpush1.bf16.msra.mxu0 0
    %721 = vmatprep.subr.bf16.mxu0 0
    %722 = vmatpush1.bf16.msra.mxu0 0
    %723 = vmatprep.subr.bf16.mxu0 0
    %724 = vmatpush1.bf16.msra.mxu0 0
    %725 = vmatprep.subr.bf16.mxu0 0
    %726 = vmatpush1.bf16.msra.mxu0 0
    %727 = vmatprep.subr.bf16.mxu0 0
    %728 = vmatpush1.bf16.msra.mxu0 0
    %729 = vmatprep.subr.bf16.mxu0 0
    %730 = vmatpush1.bf16.msra.mxu0 0
    %731 = vmatprep.subr.bf16.mxu0 0
    %732 = vmatpush1.bf16.msra.mxu0 0
    %733 = vmatprep.subr.bf16.mxu0 0
    %734 = vmatpush1.bf16.msra.mxu0 0
    %735 = vmatprep.subr.bf16.mxu0 0
    %736 = vmatpush1.bf16.msra.mxu0 0
    %737 = vmatprep.subr.bf16.mxu0 0
    %738 = vmatpush1.bf16.msra.mxu0 0
    %739 = vmatprep.subr.bf16.mxu0 0
    %740 = vmatpush1.bf16.msra.mxu0 0
    %741 = vmatprep.subr.bf16.mxu0 0
    %742 = vmatpush1.bf16.msra.mxu0 0
    %743 = vmatprep.mubr.bf16.mxu0 0
    %744 = vmatmul.mubr.bf16.gmra.mrb[0].mxu0 %v706
    %v745 = vpop.f32.mrb[0].mxu0
    %v746 = vadd.f32 0.0, %v745
    %v747 = vpop.f32.mrb[0].mxu0
    %v748 = vpop.f32.mrb[0].mxu0
    %v749 = vpop.f32.mrb[0].mxu0
    %750 = vdwg.mxu0
    %v751 = vpack.c.bf16 %v746, %v746
    %v752 = vld [vmem:[%s9] sm:$0xf]
    %v753 = vld [vmem:[%s9 + $0x4] sm:$0xf]
    %v754 = vld [vmem:[%s9 + $0x8] sm:$0xf]
    %v755 = vld [vmem:[%s9 + $0xc] sm:$0xf]
    %v756 = vld [vmem:[%s10] sm:$0x1]
    %v758 = vlaneseq
    %v759 = vshrl.u32 %v758, 7
    %v760 = vsub.s32 0, %v759
    %v761 = vrot.slane %v756, %v760
    %v767 = vunpack.c.l.b16 %v752
    %v768 = vunpack.c.l.b16 %v753
    %v769 = vunpack.c.l.b16 %v754
    %v770 = vunpack.c.l.b16 %v755
    %v771 = vpack.c.b16 %v768, %v767
    %v772 = vpack.c.b16 %v770, %v769
    %v776 = vsel %vm114, %v751, 0
    %778 = vmatprep.subr.bf16.mxu0 0
    %779 = vmatpush1.bf16.msra.mxu0 %v771
    %780 = vmatprep.subr.bf16.mxu0 0
    %781 = vmatpush1.bf16.msra.mxu0 %v772
    %782 = vmatprep.subr.bf16.mxu0 0
    %783 = vmatpush1.bf16.msra.mxu0 0
    %784 = vmatprep.subr.bf16.mxu0 0
    %785 = vmatpush1.bf16.msra.mxu0 0
    %786 = vmatprep.subr.bf16.mxu0 0
    %787 = vmatpush1.bf16.msra.mxu0 0
    %788 = vmatprep.subr.bf16.mxu0 0
    %789 = vmatpush1.bf16.msra.mxu0 0
    %790 = vmatprep.subr.bf16.mxu0 0
    %791 = vmatpush1.bf16.msra.mxu0 0
    %792 = vmatprep.subr.bf16.mxu0 0
    %793 = vmatpush1.bf16.msra.mxu0 0
    %794 = vmatprep.subr.bf16.mxu0 0
    %795 = vmatpush1.bf16.msra.mxu0 0
    %796 = vmatprep.subr.bf16.mxu0 0
    %797 = vmatpush1.bf16.msra.mxu0 0
    %798 = vmatprep.subr.bf16.mxu0 0
    %799 = vmatpush1.bf16.msra.mxu0 0
    %800 = vmatprep.subr.bf16.mxu0 0
    %801 = vmatpush1.bf16.msra.mxu0 0
    %802 = vmatprep.subr.bf16.mxu0 0
    %803 = vmatpush1.bf16.msra.mxu0 0
    %804 = vmatprep.subr.bf16.mxu0 0
    %805 = vmatpush1.bf16.msra.mxu0 0
    %806 = vmatprep.subr.bf16.mxu0 0
    %807 = vmatpush1.bf16.msra.mxu0 0
    %808 = vmatprep.subr.bf16.mxu0 0
    %809 = vmatpush1.bf16.msra.mxu0 0
    %810 = vmatprep.mubr.bf16.mxu0 0
    %811 = vmatmul.mubr.bf16.gmra.mrb[0].mxu0 %v776
    %v812 = vpop.f32.mrb[0].mxu0
    %v813 = vadd.f32 %v761, %v812
    %v814 = vpop.f32.mrb[0].mxu0
    %v815 = vpop.f32.mrb[0].mxu0
    %v816 = vpop.f32.mrb[0].mxu0
    %817 = vdwg.mxu0
    %vm818 = vcmask 123904
    %819 = vst.msk [vmem:[#allocation9] sm:$0x3] %vm818, %v813
    // Predicated region
    $region54: #{tpu_custom_call.1} parent=1 // pred_check
      _
    $region55: #{tpu_custom_call.1} parent=1 // pred_check_branch
      %821 = sbr.rel (0) target = $region57
    $region56: #{tpu_custom_call.1} parent=1 // pred_region
      %s823 = ssub.s32 32, 32
      %824 = vsyncadd [#allocation6], %s823
      %s826 = sshll.u32 [#allocation9], 4
      %s827 = int_to_ptr.vmem [resolvable:$true] %s826
      %829 = dma.vmem_to_hbm [thread:$0]  %s827, 32, %s11, [#allocation6]
    $region57: #{tpu_custom_call.1} parent=1 // pred_fallthru
      _
    // Predicated region
    $region58: #{tpu_custom_call.1} parent=1 // pred_check
      _
    $region59: #{tpu_custom_call.1} parent=1 // pred_check_branch
      %831 = sbr.rel (0) target = $region61
    $region60: #{tpu_custom_call.1} parent=1 // pred_region
      %832 = dma.done [#allocation6], 32
    $region61: #{tpu_custom_call.1} parent=1 // pred_fallthru
      _
    %833 = vsyncpa [#allocation5], 1
    %834 = vsyncpa [#allocation8], 1
    %835 = vsyncpa [#allocation6], 1

// kernel: tpu_custom_call.1
$region0: #{tpu_custom_call.1}
  #allocation0 [shape = 'u32[]', space=smem, size = 0x4, offset = 0x4, fixed_abs, tag = 'smem constant byte address 0x4 - core index']
  #allocation1 [shape = 'u32[144,128]{1,0:T(1,128)}', space=vmem, size = 0x12000, scoped, tag = 'internal scratch']
  #allocation2 [shape = 'bf16[34,32]{1,0:T(8,128)(2,1)}', space=vmem, size = 0x2800, scoped, tag = 'scratch operand']
  #allocation3 [shape = 'bf16[34,4]{1,0:T(8,128)(2,1)}', space=vmem, size = 0x2800, scoped, tag = 'scratch operand']
  %s0 = inlined_call_operand.vmem [shape: bf16[1,32,32], index: 0, kind: input, shape index: {}]
  %s1 = inlined_call_operand.vmem [shape: f32[32,32], index: 1, kind: input, shape index: {}]
  %s2 = inlined_call_operand.hbm [shape: f32[1,32], index: 2, kind: input, shape index: {}]
  %s3 = inlined_call_operand.hbm [shape: bf16[2,34], index: 3, kind: input, shape index: {}]
  %s4 = inlined_call_operand.vmem [shape: bf16[34,2], index: 4, kind: input, shape index: {}]
  %s5 = inlined_call_operand.vmem [shape: bf16[32,96], index: 5, kind: input, shape index: {}]
  %s6 = inlined_call_operand.vmem [shape: f32[1,96], index: 6, kind: input, shape index: {}]
  %s7 = inlined_call_operand.vmem [shape: bf16[32,4], index: 7, kind: input, shape index: {}]
  %s8 = inlined_call_operand.vmem [shape: bf16[4,32], index: 8, kind: input, shape index: {}]
  %s9 = inlined_call_operand.vmem [shape: bf16[32,16], index: 9, kind: input, shape index: {}]
  %s10 = inlined_call_operand.vmem [shape: f32[1,16], index: 10, kind: input, shape index: {}]
  %s11 = inlined_call_operand.hbm [shape: f32[1,2,16], index: 11, kind: output, shape index: {}]
  %s12 = sld [smem:[#allocation0]]
  $region62: #{tpu_custom_call.1} parent=0
    _
  %s14 = ssub.s32 1, %s12
  %s15 = scalar_select 0, %s14, %s12
  $region1: #{tpu_custom_call.1} parent=0
    #allocation4 [shape = 'u8[512]{0}', space=vmem, size = 0x400, scoped, tag = 'input window, operand 2, single buffered']
    #allocation5 [shape = 's32[1]{0}', space=sflag, size = 0x4, scoped, tag = 'scoped memory for tpu_custom_call.1']
    #allocation6 [shape = 's32[1]{0}', space=sflag, size = 0x4, scoped, tag = 'scoped memory for tpu_custom_call.1']
    #allocation7 [shape = 'u8[512]{0}', space=vmem, size = 0x400, scoped, tag = 'input window, operand 3, single buffered']
    #allocation8 [shape = 's32[1]{0}', space=sflag, size = 0x4, scoped, tag = 'scoped memory for tpu_custom_call.1']
    #allocation9 [shape = 'u8[1024]{0}', space=vmem, size = 0x400, scoped, tag = 'output window, operand 0, single buffered']
    %16 = vsyncpa [#allocation5], 0
    %17 = vsyncpa [#allocation8], 0
    %18 = vsyncpa [#allocation6], 0
    // Predicated region
    $region2: #{tpu_custom_call.1} parent=1 // pred_check
      _
    $region3: #{tpu_custom_call.1} parent=1 // pred_check_branch
      %20 = sbr.rel (0) target = $region5
    $region4: #{tpu_custom_call.1} parent=1 // pred_region
      _
    $region5: #{tpu_custom_call.1} parent=1 // pred_fallthru
      _
    // Predicated region
    $region6: #{tpu_custom_call.1} parent=1 // pred_check
      _
    $region7: #{tpu_custom_call.1} parent=1 // pred_check_branch
      %22 = sbr.rel (0) target = $region9
    $region8: #{tpu_custom_call.1} parent=1 // pred_region
      _
    $region9: #{tpu_custom_call.1} parent=1 // pred_fallthru
      _
    // Predicated region
    $region10: #{tpu_custom_call.1} parent=1 // pred_check
      _
    $region11: #{tpu_custom_call.1} parent=1 // pred_check_branch
      %24 = sbr.rel (0) target = $region13
    $region12: #{tpu_custom_call.1} parent=1 // pred_region
      %s26 = ssub.s32 16, 16
      %27 = vsyncadd [#allocation5], %s26
      %s29 = sshll.u32 [#allocation4], 4
      %s30 = int_to_ptr.vmem [resolvable:$true] %s29
      %32 = dma.hbm_to_vmem [thread:$0]  %s2, 16, %s30, [#allocation5]
    $region13: #{tpu_custom_call.1} parent=1 // pred_fallthru
      _
    // Predicated region
    $region14: #{tpu_custom_call.1} parent=1 // pred_check
      _
    $region15: #{tpu_custom_call.1} parent=1 // pred_check_branch
      %34 = sbr.rel (0) target = $region17
    $region16: #{tpu_custom_call.1} parent=1 // pred_region
      %s36 = ssub.s32 16, 16
      %37 = vsyncadd [#allocation8], %s36
      %s39 = sshll.u32 [#allocation7], 4
      %s40 = int_to_ptr.vmem [resolvable:$true] %s39
      %42 = dma.hbm_to_vmem [thread:$0]  %s3, 16, %s40, [#allocation8]
    $region17: #{tpu_custom_call.1} parent=1 // pred_fallthru
      _
    // Predicated region
    $region18: #{tpu_custom_call.1} parent=1 // pred_check
      _
    $region19: #{tpu_custom_call.1} parent=1 // pred_check_branch
      %44 = sbr.rel (0) target = $region21
    $region20: #{tpu_custom_call.1} parent=1 // pred_region
      _
    $region21: #{tpu_custom_call.1} parent=1 // pred_fallthru
      _
    // Predicated region
    $region22: #{tpu_custom_call.1} parent=1 // pred_check
      _
    $region23: #{tpu_custom_call.1} parent=1 // pred_check_branch
      %46 = sbr.rel (0) target = $region25
    $region24: #{tpu_custom_call.1} parent=1 // pred_region
      _
    $region25: #{tpu_custom_call.1} parent=1 // pred_fallthru
      _
    // Predicated region
    $region26: #{tpu_custom_call.1} parent=1 // pred_check
      _
    $region27: #{tpu_custom_call.1} parent=1 // pred_check_branch
      %48 = sbr.rel (0) target = $region29
    $region28: #{tpu_custom_call.1} parent=1 // pred_region
      _
    $region29: #{tpu_custom_call.1} parent=1 // pred_fallthru
      _
    // Predicated region
    $region30: #{tpu_custom_call.1} parent=1 // pred_check
      _
    $region31: #{tpu_custom_call.1} parent=1 // pred_check_branch
      %50 = sbr.rel (0) target = $region33
    $region32: #{tpu_custom_call.1} parent=1 // pred_region
      _
    $region33: #{tpu_custom_call.1} parent=1 // pred_fallthru
      _
    // Predicated region
    $region34: #{tpu_custom_call.1} parent=1 // pred_check
      _
    $region35: #{tpu_custom_call.1} parent=1 // pred_check_branch
      %52 = sbr.rel (0) target = $region37
    $region36: #{tpu_custom_call.1} parent=1 // pred_region
      _
    $region37: #{tpu_custom_call.1} parent=1 // pred_fallthru
      _
    // Predicated region
    $region38: #{tpu_custom_call.1} parent=1 // pred_check
      _
    $region39: #{tpu_custom_call.1} parent=1 // pred_check_branch
      %54 = sbr.rel (0) target = $region41
    $region40: #{tpu_custom_call.1} parent=1 // pred_region
      _
    $region41: #{tpu_custom_call.1} parent=1 // pred_fallthru
      _
    // Predicated region
    $region42: #{tpu_custom_call.1} parent=1 // pred_check
      _
    $region43: #{tpu_custom_call.1} parent=1 // pred_check_branch
      %56 = sbr.rel (0) target = $region45
    $region44: #{tpu_custom_call.1} parent=1 // pred_region
      _
    $region45: #{tpu_custom_call.1} parent=1 // pred_fallthru
      _
    // Predicated region
    $region46: #{tpu_custom_call.1} parent=1 // pred_check
      _
    $region47: #{tpu_custom_call.1} parent=1 // pred_check_branch
      %58 = sbr.rel (0) target = $region49
    $region48: #{tpu_custom_call.1} parent=1 // pred_region
      %59 = dma.done [#allocation5], 16
    $region49: #{tpu_custom_call.1} parent=1 // pred_fallthru
      _
    // Predicated region
    $region50: #{tpu_custom_call.1} parent=1 // pred_check
      _
    $region51: #{tpu_custom_call.1} parent=1 // pred_check_branch
      %61 = sbr.rel (0) target = $region53
    $region52: #{tpu_custom_call.1} parent=1 // pred_region
      %62 = dma.done [#allocation8], 16
    $region53: #{tpu_custom_call.1} parent=1 // pred_fallthru
      _
    %v64 = vld [vmem:[%s0] sm:$0xf]
    %v65 = vld [vmem:[%s0 + $0x4] sm:$0xf]
    %v66 = vld [vmem:[%s0 + $0x8] sm:$0xf]
    %v67 = vld [vmem:[%s0 + $0xc] sm:$0xf]
    %v68 = vunpack.c.l.bf16 %v64
    %v69 = vunpack.c.l.bf16 %v65
    %v70 = vunpack.c.l.bf16 %v66
    %v71 = vunpack.c.l.bf16 %v67
    %v72 = vld [vmem:[%s1] sm:$0xff]
    %v73 = vld [vmem:[%s1 + $0x8] sm:$0xff]
    %v74 = vld [vmem:[%s1 + $0x10] sm:$0xff]
    %v75 = vld [vmem:[%s1 + $0x18] sm:$0xff]
    %v76 = vadd.f32 %v68, %v72
    %v77 = vadd.f32 %v69, %v73
    %v78 = vadd.f32 %v70, %v74
    %v79 = vadd.f32 %v71, %v75
    %v80 = vpack.c.bf16 %v77, %v76
    %v81 = vpack.c.bf16 %v79, %v78
    %v84 = vunpack.c.l.b16 %v80
    %v85 = vunpack.c.h.b16 %v80
    %v86 = vunpack.c.l.b16 %v81
    %v87 = vunpack.c.h.b16 %v81
    %v88 = vpack.c.b16 %v84, %v84
    %v89 = vpack.c.b16 %v85, %v85
    %v90 = vpack.c.b16 %v86, %v86
    %v91 = vpack.c.b16 %v87, %v87
    %vm96 = vcmask 257024
    %97 = vst.msk [vmem:[#allocation2] sm:$0xf] %vm96, %v88
    %98 = vst.msk [vmem:[#allocation2 + $0x4] sm:$0xf] %vm96, %v89
    %99 = vst.msk [vmem:[#allocation2 + $0x8] sm:$0xf] %vm96, %v90
    %100 = vst.msk [vmem:[#allocation2 + $0xc] sm:$0xf] %vm96, %v91
    %v101 = vld [vmem:[#allocation7] sm:$0x1]
    %v106 = vunpack.c.l.b16 %v64
    %v107 = vunpack.c.l.b16 %v65
    %v108 = vunpack.c.l.b16 %v66
    %v109 = vunpack.c.l.b16 %v67
    %v110 = vpack.c.b16 %v107, %v106
    %v111 = vpack.c.b16 %v109, %v108
    %vm114 = vcmask 261120
    %v116 = vsel %vm114, %v101, 0
    %118 = vmatprep.subr.bf16.mxu0 0
    %119 = vmatpush1.bf16.msra.mxu0 %v110
    %120 = vmatprep.subr.bf16.mxu0 0
    %121 = vmatpush1.bf16.msra.mxu0 %v111
    %122 = vmatprep.subr.bf16.mxu0 0
    %123 = vmatpush1.bf16.msra.mxu0 0
    %124 = vmatprep.subr.bf16.mxu0 0
    %125 = vmatpush1.bf16.msra.mxu0 0
    %126 = vmatprep.subr.bf16.mxu0 0
    %127 = vmatpush1.bf16.msra.mxu0 0
    %128 = vmatprep.subr.bf16.mxu0 0
    %129 = vmatpush1.bf16.msra.mxu0 0
    %130 = vmatprep.subr.bf16.mxu0 0
    %131 = vmatpush1.bf16.msra.mxu0 0
    %132 = vmatprep.subr.bf16.mxu0 0
    %133 = vmatpush1.bf16.msra.mxu0 0
    %134 = vmatprep.subr.bf16.mxu0 0
    %135 = vmatpush1.bf16.msra.mxu0 0
    %136 = vmatprep.subr.bf16.mxu0 0
    %137 = vmatpush1.bf16.msra.mxu0 0
    %138 = vmatprep.subr.bf16.mxu0 0
    %139 = vmatpush1.bf16.msra.mxu0 0
    %140 = vmatprep.subr.bf16.mxu0 0
    %141 = vmatpush1.bf16.msra.mxu0 0
    %142 = vmatprep.subr.bf16.mxu0 0
    %143 = vmatpush1.bf16.msra.mxu0 0
    %144 = vmatprep.subr.bf16.mxu0 0
    %145 = vmatpush1.bf16.msra.mxu0 0
    %146 = vmatprep.subr.bf16.mxu0 0
    %147 = vmatpush1.bf16.msra.mxu0 0
    %148 = vmatprep.subr.bf16.mxu0 0
    %149 = vmatpush1.bf16.msra.mxu0 0
    %150 = vmatprep.mubr.bf16.mxu0 0
    %151 = vmatmul.mubr.bf16.gmra.mrb[0].mxu0 %v116
    %v152 = vpop.f32.mrb[0].mxu0
    %v153 = vadd.f32 0.0, %v152
    %v154 = vpop.f32.mrb[0].mxu0
    %v155 = vpop.f32.mrb[0].mxu0
    %v156 = vpop.f32.mrb[0].mxu0
    %157 = vdwg.mxu0
    %v158 = vmul.f32 %v153, 0.0625
    %v159 = vld [vmem:[#allocation4] sm:$0x1]
    %v161 = vlaneseq
    %v162 = vshrl.u32 %v161, 7
    %v163 = vsub.s32 0, %v162
    %v164 = vrot.slane %v159, %v163
    %v166 = vadd.f32 %v158, %v164
    %v167 = vpack.c.bf16 %v166, %v166
    %vm168 = vcmask 253952
    %169 = vst.msk [vmem:[#allocation2 + $0x10] sm:$0x1] %vm168, %v167
    %v170 = vld [vmem:[#allocation2] sm:$0xf]
    %v171 = vld [vmem:[#allocation2 + $0x4] sm:$0xf]
    %v172 = vld [vmem:[#allocation2 + $0x8] sm:$0xf]
    %v173 = vld [vmem:[#allocation2 + $0xc] sm:$0xf]
    %v174 = vld [vmem:[#allocation2 + $0x10] sm:$0x1]
    %v175 = vld [vmem:[%s5] sm:$0xf]
    %v176 = vld [vmem:[%s5 + $0x4] sm:$0xf]
    %v177 = vld [vmem:[%s5 + $0x8] sm:$0xf]
    %v178 = vld [vmem:[%s5 + $0xc] sm:$0xf]
    %v179 = vld [vmem:[%s6] sm:$0x1]
    %v181 = vlaneseq
    %v182 = vshrl.u32 %v181, 7
    %v183 = vsub.s32 0, %v182
    %v184 = vrot.slane %v179, %v183
    %v191 = vunpack.c.l.b16 %v170
    %v192 = vunpack.c.l.b16 %v171
    %v193 = vunpack.c.l.b16 %v172
    %v194 = vunpack.c.l.b16 %v173
    %v195 = vunpack.c.l.b16 %v174
    %v196 = vpack.c.b16 %v192, %v191
    %v197 = vpack.c.b16 %v194, %v193
    %v198 = vpack.c.b16 %v195, %v195
    %v203 = vunpack.c.l.b16 %v175
    %v204 = vunpack.c.l.b16 %v176
    %v205 = vunpack.c.l.b16 %v177
    %v206 = vunpack.c.l.b16 %v178
    %v207 = vpack.c.b16 %v204, %v203
    %v208 = vpack.c.b16 %v206, %v205
    %v212 = vsel %vm114, %v196, 0
    %v215 = vsel %vm114, %v197, 0
    %v218 = vsel %vm114, %v198, 0
    %220 = vmatprep.subr.bf16.mxu0 0
    %221 = vmatpush1.bf16.msra.mxu0 %v207
    %222 = vmatprep.subr.bf16.mxu0 0
    %223 = vmatpush1.bf16.msra.mxu0 %v208
    %224 = vmatprep.subr.bf16.mxu0 0
    %225 = vmatpush1.bf16.msra.mxu0 0
    %226 = vmatprep.subr.bf16.mxu0 0
    %227 = vmatpush1.bf16.msra.mxu0 0
    %228 = vmatprep.subr.bf16.mxu0 0
    %229 = vmatpush1.bf16.msra.mxu0 0
    %230 = vmatprep.subr.bf16.mxu0 0
    %231 = vmatpush1.bf16.msra.mxu0 0
    %232 = vmatprep.subr.bf16.mxu0 0
    %233 = vmatpush1.bf16.msra.mxu0 0
    %234 = vmatprep.subr.bf16.mxu0 0
    %235 = vmatpush1.bf16.msra.mxu0 0
    %236 = vmatprep.subr.bf16.mxu0 0
    %237 = vmatpush1.bf16.msra.mxu0 0
    %238 = vmatprep.subr.bf16.mxu0 0
    %239 = vmatpush1.bf16.msra.mxu0 0
    %240 = vmatprep.subr.bf16.mxu0 0
    %241 = vmatpush1.bf16.msra.mxu0 0
    %242 = vmatprep.subr.bf16.mxu0 0
    %243 = vmatpush1.bf16.msra.mxu0 0
    %244 = vmatprep.subr.bf16.mxu0 0
    %245 = vmatpush1.bf16.msra.mxu0 0
    %246 = vmatprep.subr.bf16.mxu0 0
    %247 = vmatpush1.bf16.msra.mxu0 0
    %248 = vmatprep.subr.bf16.mxu0 0
    %249 = vmatpush1.bf16.msra.mxu0 0
    %250 = vmatprep.subr.bf16.mxu0 0
    %251 = vmatpush1.bf16.msra.mxu0 0
    %252 = vmatprep.mubr.bf16.mxu0 0
    %253 = vmatmul.mubr.bf16.gmra.mrb[0].mxu0 %v212
    %v254 = vpop.f32.mrb[0].mxu0
    %v255 = vadd.f32 %v184, %v254
    %v256 = vpop.f32.mrb[0].mxu0
    %v257 = vpop.f32.mrb[0].mxu0
    %v258 = vadd.f32 %v184, %v257
    %v259 = vpop.f32.mrb[0].mxu0
    %260 = vmatprep.mubr.bf16.mxu0 0
    %261 = vmatmul.mubr.bf16.gmra.mrb[0].mxu0 %v215
    %v262 = vpop.f32.mrb[0].mxu0
    %v263 = vadd.f32 %v184, %v262
    %v264 = vpop.f32.mrb[0].mxu0
    %v265 = vpop.f32.mrb[0].mxu0
    %v266 = vadd.f32 %v184, %v265
    %v267 = vpop.f32.mrb[0].mxu0
    %268 = vmatprep.mubr.bf16.mxu0 0
    %269 = vmatmul.mubr.bf16.gmra.mrb[0].mxu0 %v218
    %v270 = vpop.f32.mrb[0].mxu0
    %v271 = vadd.f32 %v184, %v270
    %v272 = vpop.f32.mrb[0].mxu0
    %v273 = vpop.f32.mrb[0].mxu0
    %v274 = vpop.f32.mrb[0].mxu0
    %275 = vdwg.mxu0
    %v276 = vmul.f32 %v271, 0.35355338
    %v277 = vld [vmem:[%s4] sm:$0xf]
    %v278 = vld [vmem:[%s4 + $0x4] sm:$0xf]
    %v279 = vld [vmem:[%s4 + $0x8] sm:$0xf]
    %v280 = vld [vmem:[%s4 + $0xc] sm:$0xf]
    %v281 = vld [vmem:[%s4 + $0x10] sm:$0x1]
    %v282 = vpack.c.bf16 %v276, %v276
    %v288 = vunpack.c.l.b16 %v277
    %v289 = vunpack.c.l.b16 %v278
    %v290 = vunpack.c.l.b16 %v279
    %v291 = vunpack.c.l.b16 %v280
    %v292 = vunpack.c.l.b16 %v281
    %v293 = vpack.c.b16 %v289, %v288
    %v294 = vpack.c.b16 %v291, %v290
    %v295 = vpack.c.b16 %v292, %v292
    %vm296 = vcmask 15360
    %v298 = vsel %vm296, %v293, 0
    %v301 = vsel %vm296, %v294, 0
    %v304 = vsel %vm296, %v295, 0
    %vm306 = vcmask 1040384
    %v308 = vsel %vm306, %v282, 0
    %310 = vmatprep.subr.bf16.mxu0 0
    %311 = vmatpush1.bf16.msra.mxu0 %v308
    %312 = vmatprep.subr.bf16.mxu0 0
    %313 = vmatpush1.bf16.msra.mxu0 0
    %314 = vmatprep.subr.bf16.mxu0 0
    %315 = vmatpush1.bf16.msra.mxu0 0
    %316 = vmatprep.subr.bf16.mxu0 0
    %317 = vmatpush1.bf16.msra.mxu0 0
    %318 = vmatprep.subr.bf16.mxu0 0
    %319 = vmatpush1.bf16.msra.mxu0 0
    %320 = vmatprep.subr.bf16.mxu0 0
    %321 = vmatpush1.bf16.msra.mxu0 0
    %322 = vmatprep.subr.bf16.mxu0 0
    %323 = vmatpush1.bf16.msra.mxu0 0
    %324 = vmatprep.subr.bf16.mxu0 0
    %325 = vmatpush1.bf16.msra.mxu0 0
    %326 = vmatprep.subr.bf16.mxu0 0
    %327 = vmatpush1.bf16.msra.mxu0 0
    %328 = vmatprep.subr.bf16.mxu0 0
    %329 = vmatpush1.bf16.msra.mxu0 0
    %330 = vmatprep.subr.bf16.mxu0 0
    %331 = vmatpush1.bf16.msra.mxu0 0
    %332 = vmatprep.subr.bf16.mxu0 0
    %333 = vmatpush1.bf16.msra.mxu0 0
    %334 = vmatprep.subr.bf16.mxu0 0
    %335 = vmatpush1.bf16.msra.mxu0 0
    %336 = vmatprep.subr.bf16.mxu0 0
    %337 = vmatpush1.bf16.msra.mxu0 0
    %338 = vmatprep.subr.bf16.mxu0 0
    %339 = vmatpush1.bf16.msra.mxu0 0
    %340 = vmatprep.subr.bf16.mxu0 0
    %341 = vmatpush1.bf16.msra.mxu0 0
    %342 = vmatprep.mubr.bf16.mxu0 0
    %343 = vmatmul.mubr.bf16.gmra.mrb[0].mxu0 %v298
    %v344 = vpop.f32.mrb[0].mxu0
    %v345 = vadd.f32 0.0, %v344
    %v346 = vpop.f32.mrb[0].mxu0
    %v347 = vpop.f32.mrb[0].mxu0
    %v348 = vadd.f32 0.0, %v347
    %v349 = vpop.f32.mrb[0].mxu0
    %350 = vmatprep.mubr.bf16.mxu0 0
    %351 = vmatmul.mubr.bf16.gmra.mrb[0].mxu0 %v301
    %v352 = vpop.f32.mrb[0].mxu0
    %v353 = vadd.f32 0.0, %v352
    %v354 = vpop.f32.mrb[0].mxu0
    %v355 = vpop.f32.mrb[0].mxu0
    %v356 = vadd.f32 0.0, %v355
    %v357 = vpop.f32.mrb[0].mxu0
    %358 = vmatprep.mubr.bf16.mxu0 0
    %359 = vmatmul.mubr.bf16.gmra.mrb[0].mxu0 %v304
    %v360 = vpop.f32.mrb[0].mxu0
    %v361 = vadd.f32 0.0, %v360
    %v362 = vpop.f32.mrb[0].mxu0
    %v363 = vpop.f32.mrb[0].mxu0
    %v364 = vpop.f32.mrb[0].mxu0
    %365 = vdwg.mxu0
    %371 = vrot.lane.b32.xlu0 %v255, 96
    %v372 = vpop.permute.xlu0 %371
    %373 = vrot.lane.b32.xlu0 %v258, 96
    %v374 = vpop.permute.xlu0 %373
    %375 = vrot.lane.b32.xlu0 %v263, 96
    %v376 = vpop.permute.xlu0 %375
    %377 = vrot.lane.b32.xlu0 %v266, 96
    %v378 = vpop.permute.xlu0 %377
    %379 = vrot.lane.b32.xlu0 %v271, 96
    %v380 = vpop.permute.xlu0 %379
    %v386 = vmul.f32 %v345, %v372
    %v387 = vmul.f32 %v348, %v374
    %v388 = vmul.f32 %v353, %v376
    %v389 = vmul.f32 %v356, %v378
    %v390 = vmul.f32 %v361, %v380
    %v391 = vpack.c.bf16 %v387, %v386
    %v392 = vpack.c.bf16 %v389, %v388
    %v393 = vpack.c.bf16 %v390, %v390
    %v394 = vld [vmem:[%s7] sm:$0xf]
    %v395 = vld [vmem:[%s7 + $0x4] sm:$0xf]
    %v396 = vld [vmem:[%s7 + $0x8] sm:$0xf]
    %v397 = vld [vmem:[%s7 + $0xc] sm:$0xf]
    %v402 = vunpack.c.l.b16 %v394
    %v403 = vunpack.c.l.b16 %v395
    %v404 = vunpack.c.l.b16 %v396
    %v405 = vunpack.c.l.b16 %v397
    %v406 = vpack.c.b16 %v403, %v402
    %v407 = vpack.c.b16 %v405, %v404
    %v411 = vsel %vm114, %v391, 0
    %v414 = vsel %vm114, %v392, 0
    %v417 = vsel %vm114, %v393, 0
    %419 = vmatprep.subr.bf16.mxu0 0
    %420 = vmatpush1.bf16.msra.mxu0 %v406
    %421 = vmatprep.subr.bf16.mxu0 0
    %422 = vmatpush1.bf16.msra.mxu0 %v407
    %423 = vmatprep.subr.bf16.mxu0 0
    %424 = vmatpush1.bf16.msra.mxu0 0
    %425 = vmatprep.subr.bf16.mxu0 0
    %426 = vmatpush1.bf16.msra.mxu0 0
    %427 = vmatprep.subr.bf16.mxu0 0
    %428 = vmatpush1.bf16.msra.mxu0 0
    %429 = vmatprep.subr.bf16.mxu0 0
    %430 = vmatpush1.bf16.msra.mxu0 0
    %431 = vmatprep.subr.bf16.mxu0 0
    %432 = vmatpush1.bf16.msra.mxu0 0
    %433 = vmatprep.subr.bf16.mxu0 0
    %434 = vmatpush1.bf16.msra.mxu0 0
    %435 = vmatprep.subr.bf16.mxu0 0
    %436 = vmatpush1.bf16.msra.mxu0 0
    %437 = vmatprep.subr.bf16.mxu0 0
    %438 = vmatpush1.bf16.msra.mxu0 0
    %439 = vmatprep.subr.bf16.mxu0 0
    %440 = vmatpush1.bf16.msra.mxu0 0
    %441 = vmatprep.subr.bf16.mxu0 0
    %442 = vmatpush1.bf16.msra.mxu0 0
    %443 = vmatprep.subr.bf16.mxu0 0
    %444 = vmatpush1.bf16.msra.mxu0 0
    %445 = vmatprep.subr.bf16.mxu0 0
    %446 = vmatpush1.bf16.msra.mxu0 0
    %447 = vmatprep.subr.bf16.mxu0 0
    %448 = vmatpush1.bf16.msra.mxu0 0
    %449 = vmatprep.subr.bf16.mxu0 0
    %450 = vmatpush1.bf16.msra.mxu0 0
    %451 = vmatprep.mubr.bf16.mxu0 0
    %452 = vmatmul.mubr.bf16.gmra.mrb[0].mxu0 %v411
    %v453 = vpop.f32.mrb[0].mxu0
    %v454 = vadd.f32 0.0, %v453
    %v455 = vpop.f32.mrb[0].mxu0
    %v456 = vpop.f32.mrb[0].mxu0
    %v457 = vadd.f32 0.0, %v456
    %v458 = vpop.f32.mrb[0].mxu0
    %459 = vmatprep.mubr.bf16.mxu0 0
    %460 = vmatmul.mubr.bf16.gmra.mrb[0].mxu0 %v414
    %v461 = vpop.f32.mrb[0].mxu0
    %v462 = vadd.f32 0.0, %v461
    %v463 = vpop.f32.mrb[0].mxu0
    %v464 = vpop.f32.mrb[0].mxu0
    %v465 = vadd.f32 0.0, %v464
    %v466 = vpop.f32.mrb[0].mxu0
    %467 = vmatprep.mubr.bf16.mxu0 0
    %468 = vmatmul.mubr.bf16.gmra.mrb[0].mxu0 %v417
    %v469 = vpop.f32.mrb[0].mxu0
    %v470 = vadd.f32 0.0, %v469
    %v471 = vpop.f32.mrb[0].mxu0
    %v472 = vpop.f32.mrb[0].mxu0
    %v473 = vpop.f32.mrb[0].mxu0
    %474 = vdwg.mxu0
    %vm475 = vcmask 31744
    %v476 = vsel %vm475, %v454, -inf
    %v477 = vsel %vm475, %v457, -inf
    %v478 = vmax.f32 %v476, %v477
    %v479 = vrot.slane %v478, 4
    %v480 = vmax.f32 %v478, %v479
    %v481 = vrot.slane %v480, 2
    %v482 = vmax.f32 %v480, %v481
    %v483 = vrot.slane %v482, 1
    %v484 = vmax.f32 %v482, %v483
    %v485 = vmax.f32 %v484, %v470
    %v486 = vlaneseq
    %v487 = vshrl.u32 %v486, 7
    %v488 = vsub.s32 0, %v487
    %v489 = vrot.slane %v485, %v488
    %v490 = vsub.f32 %v454, %v489
    %v491 = vsub.f32 %v457, %v489
    %v492 = vmul.f32 %v490, 1.442695
    %v493 = vpow.pop %v492
    %v494 = vmul.f32 %v491, 1.442695
    %v495 = vpow.pop %v494
    %v496 = vsub.f32 %v470, %v485
    %v497 = vmul.f32 %v496, 1.442695
    %v498 = vpow.pop %v497
    %v499 = vsel %vm475, %v493, 0.0
    %v500 = vsel %vm475, %v495, 0.0
    %v501 = vadd.f32 %v499, %v500
    %v502 = vrot.slane %v501, 4
    %v503 = vadd.f32 %v501, %v502
    %v504 = vrot.slane %v503, 2
    %v505 = vadd.f32 %v503, %v504
    %v506 = vrot.slane %v505, 1
    %v507 = vadd.f32 %v505, %v506
    %v508 = vadd.f32 %v507, %v498
    %v509 = vrcp.pop %v508
    %v510 = vmul.f32 1.0, %v509
    %v511 = vlaneseq
    %v512 = vshrl.u32 %v511, 7
    %v513 = vsub.s32 0, %v512
    %v514 = vrot.slane %v510, %v513
    %v515 = vmul.f32 %v493, %v514
    %v516 = vmul.f32 %v495, %v514
    %v517 = vpack.c.bf16 %v516, %v515
    %v519 = vunpack.c.l.b16 %v517
    %v520 = vunpack.c.h.b16 %v517
    %v521 = vpack.c.b16 %v519, %v519
    %v522 = vpack.c.b16 %v520, %v520
    %vm525 = vcmask 27648
    %526 = vst.msk [vmem:[#allocation3] sm:$0xf] %vm525, %v521
    %527 = vst.msk [vmem:[#allocation3 + $0x4] sm:$0xf] %vm525, %v522
    %v528 = vmul.f32 %v498, %v510
    %v529 = vpack.c.bf16 %v528, %v528
    %vm530 = vcmask 24576
    %vm531 = vsmask.f32 256
    %vm532 = vmand %vm530, %vm531
    %v533 = vld [vmem:[#allocation3 + $0x10] sm:$0x1]
    %v534 = vsel %vm532, %v529, %v533
    %535 = vst [vmem:[#allocation3 + $0x10] sm:$0x1] %v534
    %v536 = vsel %vm475, %v462, -inf
    %v537 = vsel %vm475, %v465, -inf
    %v538 = vmax.f32 %v536, %v537
    %v539 = vrot.slane %v538, 4
    %v540 = vmax.f32 %v538, %v539
    %v541 = vrot.slane %v540, 2
    %v542 = vmax.f32 %v540, %v541
    %v543 = vrot.slane %v542, 1
    %v544 = vmax.f32 %v542, %v543
    %v545 = vmax.f32 %v544, %v470
    %v546 = vlaneseq
    %v547 = vshrl.u32 %v546, 7
    %v548 = vsub.s32 1, %v547
    %v549 = vrot.slane %v545, %v548
    %v550 = vsub.f32 %v462, %v549
    %v551 = vsub.f32 %v465, %v549
    %v552 = vmul.f32 %v550, 1.442695
    %v553 = vpow.pop %v552
    %v554 = vmul.f32 %v551, 1.442695
    %v555 = vpow.pop %v554
    %v556 = vsub.f32 %v470, %v545
    %v557 = vmul.f32 %v556, 1.442695
    %v558 = vpow.pop %v557
    %v559 = vsel %vm475, %v553, 0.0
    %v560 = vsel %vm475, %v555, 0.0
    %v561 = vadd.f32 %v559, %v560
    %v562 = vrot.slane %v561, 4
    %v563 = vadd.f32 %v561, %v562
    %v564 = vrot.slane %v563, 2
    %v565 = vadd.f32 %v563, %v564
    %v566 = vrot.slane %v565, 1
    %v567 = vadd.f32 %v565, %v566
    %v568 = vadd.f32 %v567, %v558
    %v569 = vrcp.pop %v568
    %v570 = vmul.f32 1.0, %v569
    %v571 = vlaneseq
    %v572 = vshrl.u32 %v571, 7
    %v573 = vsub.s32 1, %v572
    %v574 = vrot.slane %v570, %v573
    %v575 = vmul.f32 %v553, %v574
    %v576 = vmul.f32 %v555, %v574
    %v577 = vpack.c.bf16 %v576, %v575
    %v579 = vunpack.c.l.b16 %v577
    %v580 = vunpack.c.h.b16 %v577
    %v581 = vpack.c.b16 %v579, %v579
    %v582 = vpack.c.b16 %v580, %v580
    %585 = vst.msk [vmem:[#allocation3 + $0x8] sm:$0xf] %vm525, %v581
    %586 = vst.msk [vmem:[#allocation3 + $0xc] sm:$0xf] %vm525, %v582
    %v587 = vmul.f32 %v558, %v570
    %v588 = vpack.c.bf16 %v587, %v587
    %vm589 = vsmask.f32 7938
    %vm590 = vmand %vm530, %vm589
    %v591 = vld [vmem:[#allocation3 + $0x10] sm:$0x1]
    %v592 = vsel %vm590, %v588, %v591
    %593 = vst [vmem:[#allocation3 + $0x10] sm:$0x1] %v592
    %v594 = vld [vmem:[#allocation3] sm:$0xf]
    %v595 = vld [vmem:[#allocation3 + $0x4] sm:$0xf]
    %v596 = vld [vmem:[#allocation3 + $0x8] sm:$0xf]
    %v597 = vld [vmem:[#allocation3 + $0xc] sm:$0xf]
    %v598 = vld [vmem:[#allocation3 + $0x10] sm:$0x1]
    %v599 = vld [vmem:[%s8] sm:$0x3]
    %v605 = vunpack.c.l.b16 %v594
    %v606 = vunpack.c.l.b16 %v595
    %v607 = vunpack.c.l.b16 %v596
    %v608 = vunpack.c.l.b16 %v597
    %v609 = vunpack.c.l.b16 %v598
    %v610 = vpack.c.b16 %v606, %v605
    %v611 = vpack.c.b16 %v608, %v607
    %v612 = vpack.c.b16 %v609, %v609
    %v614 = vsel %vm475, %v610, 0
    %v617 = vsel %vm475, %v611, 0
    %v620 = vsel %vm475, %v612, 0
    %vm622 = vcmask 1041408
    %v624 = vsel %vm622, %v599, 0
    %626 = vmatprep.subr.bf16.mxu0 0
    %627 = vmatpush1.bf16.msra.mxu0 %v624
    %628 = vmatprep.subr.bf16.mxu0 0
    %629 = vmatpush1.bf16.msra.mxu0 0
    %630 = vmatprep.subr.bf16.mxu0 0
    %631 = vmatpush1.bf16.msra.mxu0 0
    %632 = vmatprep.subr.bf16.mxu0 0
    %633 = vmatpush1.bf16.msra.mxu0 0
    %634 = vmatprep.subr.bf16.mxu0 0
    %635 = vmatpush1.bf16.msra.mxu0 0
    %636 = vmatprep.subr.bf16.mxu0 0
    %637 = vmatpush1.bf16.msra.mxu0 0
    %638 = vmatprep.subr.bf16.mxu0 0
    %639 = vmatpush1.bf16.msra.mxu0 0
    %640 = vmatprep.subr.bf16.mxu0 0
    %641 = vmatpush1.bf16.msra.mxu0 0
    %642 = vmatprep.subr.bf16.mxu0 0
    %643 = vmatpush1.bf16.msra.mxu0 0
    %644 = vmatprep.subr.bf16.mxu0 0
    %645 = vmatpush1.bf16.msra.mxu0 0
    %646 = vmatprep.subr.bf16.mxu0 0
    %647 = vmatpush1.bf16.msra.mxu0 0
    %648 = vmatprep.subr.bf16.mxu0 0
    %649 = vmatpush1.bf16.msra.mxu0 0
    %650 = vmatprep.subr.bf16.mxu0 0
    %651 = vmatpush1.bf16.msra.mxu0 0
    %652 = vmatprep.subr.bf16.mxu0 0
    %653 = vmatpush1.bf16.msra.mxu0 0
    %654 = vmatprep.subr.bf16.mxu0 0
    %655 = vmatpush1.bf16.msra.mxu0 0
    %656 = vmatprep.subr.bf16.mxu0 0
    %657 = vmatpush1.bf16.msra.mxu0 0
    %658 = vmatprep.mubr.bf16.mxu0 0
    %659 = vmatmul.mubr.bf16.gmra.mrb[0].mxu0 %v614
    %v660 = vpop.f32.mrb[0].mxu0
    %v661 = vadd.f32 0.0, %v660
    %v662 = vpop.f32.mrb[0].mxu0
    %v663 = vpop.f32.mrb[0].mxu0
    %v664 = vadd.f32 0.0, %v663
    %v665 = vpop.f32.mrb[0].mxu0
    %666 = vmatprep.mubr.bf16.mxu0 0
    %667 = vmatmul.mubr.bf16.gmra.mrb[0].mxu0 %v617
    %v668 = vpop.f32.mrb[0].mxu0
    %v669 = vadd.f32 0.0, %v668
    %v670 = vpop.f32.mrb[0].mxu0
    %v671 = vpop.f32.mrb[0].mxu0
    %v672 = vadd.f32 0.0, %v671
    %v673 = vpop.f32.mrb[0].mxu0
    %674 = vmatprep.mubr.bf16.mxu0 0
    %675 = vmatmul.mubr.bf16.gmra.mrb[0].mxu0 %v620
    %v676 = vpop.f32.mrb[0].mxu0
    %v677 = vadd.f32 0.0, %v676
    %v678 = vpop.f32.mrb[0].mxu0
    %v679 = vpop.f32.mrb[0].mxu0
    %v680 = vpop.f32.mrb[0].mxu0
    %681 = vdwg.mxu0
    %682 = vrot.lane.b32.xlu0 %v255, 64
    %v683 = vpop.permute.xlu0 %682
    %684 = vrot.lane.b32.xlu0 %v258, 64
    %v685 = vpop.permute.xlu0 %684
    %686 = vrot.lane.b32.xlu0 %v263, 64
    %v687 = vpop.permute.xlu0 %686
    %688 = vrot.lane.b32.xlu0 %v266, 64
    %v689 = vpop.permute.xlu0 %688
    %690 = vrot.lane.b32.xlu0 %v271, 64
    %v691 = vpop.permute.xlu0 %690
    %v697 = vmul.f32 %v661, %v683
    %v698 = vmul.f32 %v664, %v685
    %v699 = vmul.f32 %v669, %v687
    %v700 = vmul.f32 %v672, %v689
    %v701 = vmul.f32 %v677, %v691
    %v702 = vpack.c.bf16 %v698, %v697
    %v703 = vpack.c.bf16 %v700, %v699
    %v704 = vpack.c.bf16 %v701, %v701
    %vm705 = vcmask 277504
    %v706 = vsel %vm705, %v101, 0
    %v709 = vsel %vm306, %v704, 0
    %711 = vmatprep.subr.bf16.mxu0 0
    %712 = vmatpush1.bf16.msra.mxu0 %v702
    %713 = vmatprep.subr.bf16.mxu0 0
    %714 = vmatpush1.bf16.msra.mxu0 %v703
    %715 = vmatprep.subr.bf16.mxu0 0
    %716 = vmatpush1.bf16.msra.mxu0 %v709
    %717 = vmatprep.subr.bf16.mxu0 0
    %718 = vmatpush1.bf16.msra.mxu0 0
    %719 = vmatprep.subr.bf16.mxu0 0
    %720 = vmatpush1.bf16.msra.mxu0 0
    %721 = vmatprep.subr.bf16.mxu0 0
    %722 = vmatpush1.bf16.msra.mxu0 0
    %723 = vmatprep.subr.bf16.mxu0 0
    %724 = vmatpush1.bf16.msra.mxu0 0
    %725 = vmatprep.subr.bf16.mxu0 0
    %726 = vmatpush1.bf16.msra.mxu0 0
    %727 = vmatprep.subr.bf16.mxu0 0
    %728 = vmatpush1.bf16.msra.mxu0 0
    %729 = vmatprep.subr.bf16.mxu0 0
    %730 = vmatpush1.bf16.msra.mxu0 0
    %731 = vmatprep.subr.bf16.mxu0 0
    %732 = vmatpush1.bf16.msra.mxu0 0
    %733 = vmatprep.subr.bf16.mxu0 0
    %734 = vmatpush1.bf16.msra.mxu0 0
    %735 = vmatprep.subr.bf16.mxu0 0
    %736 = vmatpush1.bf16.msra.mxu0 0
    %737 = vmatprep.subr.bf16.mxu0 0
    %738 = vmatpush1.bf16.msra.mxu0 0
    %739 = vmatprep.subr.bf16.mxu0 0
    %740 = vmatpush1.bf16.msra.mxu0 0
    %741 = vmatprep.subr.bf16.mxu0 0
    %742 = vmatpush1.bf16.msra.mxu0 0
    %743 = vmatprep.mubr.bf16.mxu0 0
    %744 = vmatmul.mubr.bf16.gmra.mrb[0].mxu0 %v706
    %v745 = vpop.f32.mrb[0].mxu0
    %v746 = vadd.f32 0.0, %v745
    %v747 = vpop.f32.mrb[0].mxu0
    %v748 = vpop.f32.mrb[0].mxu0
    %v749 = vpop.f32.mrb[0].mxu0
    %750 = vdwg.mxu0
    %v751 = vpack.c.bf16 %v746, %v746
    %v752 = vld [vmem:[%s9] sm:$0xf]
    %v753 = vld [vmem:[%s9 + $0x4] sm:$0xf]
    %v754 = vld [vmem:[%s9 + $0x8] sm:$0xf]
    %v755 = vld [vmem:[%s9 + $0xc] sm:$0xf]
    %v756 = vld [vmem:[%s10] sm:$0x1]
    %v758 = vlaneseq
    %v759 = vshrl.u32 %v758, 7
    %v760 = vsub.s32 0, %v759
    %v761 = vrot.slane %v756, %v760
    %v767 = vunpack.c.l.b16 %v752
    %v768 = vunpack.c.l.b16 %v753
    %v769 = vunpack.c.l.b16 %v754
    %v770 = vunpack.c.l.b16 %v755
    %v771 = vpack.c.b16 %v768, %v767
    %v772 = vpack.c.b16 %v770, %v769
    %v776 = vsel %vm114, %v751, 0
    %778 = vmatprep.subr.bf16.mxu0 0
    %779 = vmatpush1.bf16.msra.mxu0 %v771
    %780 = vmatprep.subr.bf16.mxu0 0
    %781 = vmatpush1.bf16.msra.mxu0 %v772
    %782 = vmatprep.subr.bf16.mxu0 0
    %783 = vmatpush1.bf16.msra.mxu0 0
    %784 = vmatprep.subr.bf16.mxu0 0
    %785 = vmatpush1.bf16.msra.mxu0 0
    %786 = vmatprep.subr.bf16.mxu0 0
    %787 = vmatpush1.bf16.msra.mxu0 0
    %788 = vmatprep.subr.bf16.mxu0 0
    %789 = vmatpush1.bf16.msra.mxu0 0
    %790 = vmatprep.subr.bf16.mxu0 0
    %791 = vmatpush1.bf16.msra.mxu0 0
    %792 = vmatprep.subr.bf16.mxu0 0
    %793 = vmatpush1.bf16.msra.mxu0 0
    %794 = vmatprep.subr.bf16.mxu0 0
    %795 = vmatpush1.bf16.msra.mxu0 0
    %796 = vmatprep.subr.bf16.mxu0 0
    %797 = vmatpush1.bf16.msra.mxu0 0
    %798 = vmatprep.subr.bf16.mxu0 0
    %799 = vmatpush1.bf16.msra.mxu0 0
    %800 = vmatprep.subr.bf16.mxu0 0
    %801 = vmatpush1.bf16.msra.mxu0 0
    %802 = vmatprep.subr.bf16.mxu0 0
    %803 = vmatpush1.bf16.msra.mxu0 0
    %804 = vmatprep.subr.bf16.mxu0 0
    %805 = vmatpush1.bf16.msra.mxu0 0
    %806 = vmatprep.subr.bf16.mxu0 0
    %807 = vmatpush1.bf16.msra.mxu0 0
    %808 = vmatprep.subr.bf16.mxu0 0
    %809 = vmatpush1.bf16.msra.mxu0 0
    %810 = vmatprep.mubr.bf16.mxu0 0
    %811 = vmatmul.mubr.bf16.gmra.mrb[0].mxu0 %v776
    %v812 = vpop.f32.mrb[0].mxu0
    %v813 = vadd.f32 %v761, %v812
    %v814 = vpop.f32.mrb[0].mxu0
    %v815 = vpop.f32.mrb[0].mxu0
    %v816 = vpop.f32.mrb[0].mxu0
    %817 = vdwg.mxu0
    %vm818 = vcmask 123904
    %819 = vst.msk [vmem:[#allocation9] sm:$0x3] %vm818, %v813
    // Predicated region
    $region54: #{tpu_custom_call.1} parent=1 // pred_check
      _
    $region55: #{tpu_custom_call.1} parent=1 // pred_check_branch
      %821 = sbr.rel (0) target = $region57
    $region56: #{tpu_custom_call.1} parent=1 // pred_region
      %s823 = ssub.s32 32, 32
      %824 = vsyncadd [#allocation6], %s823
      %s826 = sshll.u32 [#allocation9], 4
      %s827 = int_to_ptr.vmem [resolvable:$true] %s826
      %829 = dma.vmem_to_hbm [thread:$0]  %s827, 32, %s11, [#allocation6]
    $region57: #{tpu_custom_call.1} parent=1 // pred_fallthru
      _
    // Predicated region
    $region58: #{tpu_custom_call.1} parent=1 // pred_check
      _
    $region59: #{tpu_custom_call.1} parent=1 // pred_check_branch
      %831 = sbr.rel (0) target = $region61
    $region60: #{tpu_custom_call.1} parent=1 // pred_region
      %832 = dma.done [#allocation6], 32
    $region61: #{tpu_custom_call.1} parent=1 // pred_fallthru
      _
    %833 = vsyncpa [#allocation5], 1
    %834 = vsyncpa [#allocation8], 1
    %835 = vsyncpa [#allocation6], 1

</llo_original>
